<compile_context>
chip_gen: v7x
topology: tpu7x:2x2x1
jax: 0.10.0
libtpu: 0.0.40
codegen_flags: <defaults>
</compile_context>

<pallas_src>
import math
import functools

import jax
import jax.numpy as jnp
from jax import lax
from jax.experimental import pallas as pl
from jax.experimental.pallas import tpu as pltpu


MASK_BIAS = -1e30  # finite large-negative additive mask (avoids inf-inf NaN)


# ----------------------------- Kernel 1: fused-head attention, grid = (B,) -----------------
def _attn_kernel(q_ref, k_ref, v_ref,
                 wq_ref, bq_ref, wk_ref, bk_ref, wv_ref, bv_ref,
                 bias_ref,
                 ctx_ref, attn_ref,
                 *, n_head, d_k, d_v, inv_temperature, compute_dtype):
    # blocks:
    #   q_ref/k_ref/v_ref : (1, L, d_model)
    #   wq/wk_ref         : (d_model, n_head*d_k);  wv_ref: (d_model, n_head*d_v)
    #   bq/bk_ref         : (1, n_head*d_k);        bv_ref: (1, n_head*d_v)
    #   bias_ref          : (1, len_q, len_k)  additive mask bias (0 or -1e30)
    #   ctx_ref           : (1, len_q, n_head*d_v)
    #   attn_ref          : (n_head, 1, len_q, len_k)
    q = q_ref[0].astype(compute_dtype)
    k = k_ref[0].astype(compute_dtype)
    v = v_ref[0].astype(compute_dtype)

    # One wide projection matmul per input (all heads at once, lane-dense N).
    qh = jnp.dot(q, wq_ref[...].astype(compute_dtype),
                 preferred_element_type=jnp.float32) + bq_ref[...]
    kh = jnp.dot(k, wk_ref[...].astype(compute_dtype),
                 preferred_element_type=jnp.float32) + bk_ref[...]
    vh = jnp.dot(v, wv_ref[...].astype(compute_dtype),
                 preferred_element_type=jnp.float32) + bv_ref[...]

    # Pre-scale Q by 1/temperature (cheaper than scaling the L*L scores).
    qh = qh * jnp.float32(inv_temperature)
    bias = bias_ref[0]  # (len_q, len_k) float32

    ctx_parts = []
    for h in range(n_head):  # static loop; slices are static (free)
        qh_h = qh[:, h * d_k:(h + 1) * d_k]
        kh_h = kh[:, h * d_k:(h + 1) * d_k]
        vh_h = vh[:, h * d_v:(h + 1) * d_v]

        # q @ k^T without an explicit XLU transpose: contract last dims of both.
        scores = lax.dot_general(
            qh_h.astype(compute_dtype), kh_h.astype(compute_dtype),
            dimension_numbers=(((1,), (1,)), ((), ())),
            preferred_element_type=jnp.float32)
        scores = scores + bias

        smax = jnp.max(scores, axis=-1, keepdims=True)
        p = jnp.exp(scores - smax)
        denom = jnp.sum(p, axis=-1, keepdims=True)
        attn = p * pl.reciprocal(denom, approx=True)   # softmax over keys (dim=2)

        attn_ref[h, 0] = attn
        ctx_parts.append(jnp.dot(attn.astype(compute_dtype),
                                 vh_h.astype(compute_dtype),
                                 preferred_element_type=jnp.float32))

    # Directly in the final (len_q, n_head*d_v) layout -> no transpose glue later.
    ctx_ref[0] = jnp.concatenate(ctx_parts, axis=-1)


# ----------------------------- Kernel 2: fc + residual + layernorm (row-tiled) -------------
def _fc_ln_kernel(x_ref, res_ref, wf_ref, bf_ref, g_ref, beta_ref, out_ref,
                  *, eps, compute_dtype):
    # blocks:
    #   x_ref   : (row_tile, n_head*d_v)
    #   res_ref : (row_tile, d_model)
    #   wf_ref  : (n_head*d_v, d_model)
    #   bf/g/beta_ref : (1, d_model)
    x = x_ref[...]
    res = res_ref[...]
    y = jnp.dot(x.astype(compute_dtype), wf_ref[...].astype(compute_dtype),
                preferred_element_type=jnp.float32) + bf_ref[...]
    # dropout(fc(output)) treated as identity (eval mode)
    y = y + res
    mean = jnp.mean(y, axis=-1, keepdims=True)
    var = jnp.mean((y - mean) ** 2, axis=-1, keepdims=True)
    xhat = (y - mean) * lax.rsqrt(var + eps)
    out_ref[...] = xhat * g_ref[...] + beta_ref[...]


# ----------------------------- Wrapper -----------------------------
def multi_head_attention(q, k, v, mask, params, *, n_head, d_k, d_v,
                         compute_dtype=jnp.float32):
    """q,k,v: (B, L, d_model) float32; mask: (B, len_q, len_k) bool (True = masked)."""
    sz_b, len_q, d_model = q.shape
    _, len_k, _ = k.shape
    inv_temperature = 1.0 / float(math.pow(d_k, 0.5))

    wq, bq = params["wq"], params["bq"]   # (d_model, n_head*d_k), (1, n_head*d_k)
    wk, bk = params["wk"], params["bk"]
    wv, bv = params["wv"], params["bv"]   # (d_model, n_head*d_v), (1, n_head*d_v)
    wf, bf = params["wf"], params["bf"]   # (n_head*d_v, d_model), (1, d_model)
    gamma, beta = params["gamma"], params["beta"]  # (1, d_model) each

    # Additive mask bias (0 where keep, -1e30 where masked). Finite -> no NaN for
    # fully-masked rows; DMA'd once per batch (not per head).
    bias = mask.astype(jnp.float32) * jnp.float32(MASK_BIAS)

    kernel1 = functools.partial(
        _attn_kernel, n_head=n_head, d_k=d_k, d_v=d_v,
        inv_temperature=inv_temperature, compute_dtype=compute_dtype)

    ctx, attn4 = pl.pallas_call(
        kernel1,
        out_shape=(
            jax.ShapeDtypeStruct((sz_b, len_q, n_head * d_v), jnp.float32),
            jax.ShapeDtypeStruct((n_head, sz_b, len_q, len_k), jnp.float32),
        ),
        grid_spec=pltpu.PrefetchScalarGridSpec(
            num_scalar_prefetch=0,
            grid=(sz_b,),
            in_specs=[
                pl.BlockSpec((1, len_q, d_model), lambda b: (b, 0, 0)),       # q
                pl.BlockSpec((1, len_k, d_model), lambda b: (b, 0, 0)),       # k
                pl.BlockSpec((1, len_k, d_model), lambda b: (b, 0, 0)),       # v
                pl.BlockSpec((d_model, n_head * d_k), lambda b: (0, 0)),      # wq
                pl.BlockSpec((1, n_head * d_k), lambda b: (0, 0)),            # bq
                pl.BlockSpec((d_model, n_head * d_k), lambda b: (0, 0)),      # wk
                pl.BlockSpec((1, n_head * d_k), lambda b: (0, 0)),            # bk
                pl.BlockSpec((d_model, n_head * d_v), lambda b: (0, 0)),      # wv
                pl.BlockSpec((1, n_head * d_v), lambda b: (0, 0)),            # bv
                pl.BlockSpec((1, len_q, len_k), lambda b: (b, 0, 0)),         # mask bias
            ],
            out_specs=[
                pl.BlockSpec((1, len_q, n_head * d_v), lambda b: (b, 0, 0)),      # ctx
                pl.BlockSpec((n_head, 1, len_q, len_k), lambda b: (0, b, 0, 0)),  # attn
            ],
        ),
        compiler_params=pltpu.CompilerParams(dimension_semantics=("parallel",)),
    )(q, k, v, wq, bq, wk, bk, wv, bv, bias)

    # torch layout for attn: (n_head * sz_b, len_q, len_k); contiguous reshape (free).
    attn = attn4.reshape(n_head * sz_b, len_q, len_k)

    # Kernel 2 over flattened (B*len_q) rows; leading-dim collapses are free reshapes.
    rows = sz_b * len_q
    row_tile = rows if rows <= 512 else 512
    assert rows % row_tile == 0
    x2 = ctx.reshape(rows, n_head * d_v)
    res2 = q.reshape(rows, d_model)

    kernel2 = functools.partial(_fc_ln_kernel, eps=1e-5, compute_dtype=compute_dtype)
    out2 = pl.pallas_call(
        kernel2,
        out_shape=jax.ShapeDtypeStruct((rows, d_model), jnp.float32),
        grid_spec=pltpu.PrefetchScalarGridSpec(
            num_scalar_prefetch=0,
            grid=(rows // row_tile,),
            in_specs=[
                pl.BlockSpec((row_tile, n_head * d_v), lambda r: (r, 0)),   # ctx rows
                pl.BlockSpec((row_tile, d_model), lambda r: (r, 0)),        # residual rows
                pl.BlockSpec((n_head * d_v, d_model), lambda r: (0, 0)),    # wf (resident)
                pl.BlockSpec((1, d_model), lambda r: (0, 0)),               # bf
                pl.BlockSpec((1, d_model), lambda r: (0, 0)),               # gamma
                pl.BlockSpec((1, d_model), lambda r: (0, 0)),               # beta
            ],
            out_specs=pl.BlockSpec((row_tile, d_model), lambda r: (r, 0)),
        ),
        compiler_params=pltpu.CompilerParams(dimension_semantics=("parallel",)),
    )(x2, res2, wf, bf, gamma, beta)

    out = out2.reshape(sz_b, len_q, d_model)
    return out, attn


def init_params(key, *, n_head, d_model, d_k, d_v):
    """Deterministic synthetic parameters mirroring the PyTorch __init__ shapes.

    Weights are stored pre-transposed / head-fused: (d_model, n_head*d_k|d_v),
    column-grouped by head (same grouping as torch's .view(.., n_head, d_k))."""
    ks = jax.random.split(key, 8)
    std_qk = math.sqrt(2.0 / (d_model + d_k))
    std_v = math.sqrt(2.0 / (d_model + d_v))
    std_fc = math.sqrt(2.0 / (n_head * d_v + d_model))  # xavier_normal_
    p = {
        "wq": jax.random.normal(ks[0], (d_model, n_head * d_k), jnp.float32) * std_qk,
        "bq": jax.random.normal(ks[1], (1, n_head * d_k), jnp.float32) * 0.02,
        "wk": jax.random.normal(ks[2], (d_model, n_head * d_k), jnp.float32) * std_qk,
        "bk": jax.random.normal(ks[3], (1, n_head * d_k), jnp.float32) * 0.02,
        "wv": jax.random.normal(ks[4], (d_model, n_head * d_v), jnp.float32) * std_v,
        "bv": jax.random.normal(ks[5], (1, n_head * d_v), jnp.float32) * 0.02,
        "wf": jax.random.normal(ks[6], (n_head * d_v, d_model), jnp.float32) * std_fc,
        "bf": jnp.zeros((1, d_model), jnp.float32),
        "gamma": jnp.ones((1, d_model), jnp.float32),
        "beta": jnp.zeros((1, d_model), jnp.float32),
    }
    return p


if __name__ == "__main__":
    n_head, d_model, d_k, d_v = 4, 32, 32, 32
    B, L = 2, 8

    key = jax.random.PRNGKey(0)
    kq, kk, kv, kp, km = jax.random.split(key, 5)
    q = jax.random.normal(kq, (B, L, d_model), jnp.float32)
    k = jax.random.normal(kk, (B, L, d_model), jnp.float32)
    v = jax.random.normal(kv, (B, L, d_model), jnp.float32)
    # causal-style mask: True = masked (like torch masked_fill)
    mask = jnp.triu(jnp.ones((L, L), jnp.bool_), k=1)[None].repeat(B, axis=0)

    params = init_params(kp, n_head=n_head, d_model=d_model, d_k=d_k, d_v=d_v)

    out, attn = multi_head_attention(q, k, v, mask, params,
                                     n_head=n_head, d_k=d_k, d_v=d_v,
                                     compute_dtype=jnp.float32)
    jax.block_until_ready((out, attn))
    assert out.shape == (B, L, d_model)
    assert attn.shape == (n_head * B, L, L)
    assert bool(jnp.all(jnp.isfinite(out))) and bool(jnp.all(jnp.isfinite(attn)))
    print("KERNEL_OK")
</pallas_src>

<mosaic_0001>
module attributes {stable_mosaic.version = 11 : i64} {
  func.func @_attn_kernel(%arg0: i32, %arg1: memref<1x8x32xf32, #tpu.memory_space<vmem>>, %arg2: memref<1x8x32xf32, #tpu.memory_space<vmem>>, %arg3: memref<1x8x32xf32, #tpu.memory_space<vmem>>, %arg4: memref<32x128xf32, #tpu.memory_space<vmem>>, %arg5: memref<1x128xf32, #tpu.memory_space<vmem>>, %arg6: memref<32x128xf32, #tpu.memory_space<vmem>>, %arg7: memref<1x128xf32, #tpu.memory_space<vmem>>, %arg8: memref<32x128xf32, #tpu.memory_space<vmem>>, %arg9: memref<1x128xf32, #tpu.memory_space<vmem>>, %arg10: memref<1x8x8xf32, #tpu.memory_space<vmem>>, %arg11: memref<1x8x128xf32, #tpu.memory_space<vmem>>, %arg12: memref<4x1x8x8xf32, #tpu.memory_space<vmem>>) attributes {dimension_semantics = [#tpu.dimension_semantics<parallel>], iteration_bounds = array<i64: 2>, scalar_prefetch = 0 : i64, scratch_operands = 0 : i64, tpu.core_type = #tpu.core_type<tc>, window_params = [{transform_indices = @transform_0, window_bounds = array<i64: 1, 8, 32>}, {transform_indices = @transform_1, window_bounds = array<i64: 1, 8, 32>}, {transform_indices = @transform_2, window_bounds = array<i64: 1, 8, 32>}, {pipeline_mode = #tpu.pipeline_mode<synchronous>, transform_indices = @transform_3, window_bounds = array<i64: 32, 128>}, {pipeline_mode = #tpu.pipeline_mode<synchronous>, transform_indices = @transform_4, window_bounds = array<i64: 1, 128>}, {pipeline_mode = #tpu.pipeline_mode<synchronous>, transform_indices = @transform_5, window_bounds = array<i64: 32, 128>}, {pipeline_mode = #tpu.pipeline_mode<synchronous>, transform_indices = @transform_6, window_bounds = array<i64: 1, 128>}, {pipeline_mode = #tpu.pipeline_mode<synchronous>, transform_indices = @transform_7, window_bounds = array<i64: 32, 128>}, {pipeline_mode = #tpu.pipeline_mode<synchronous>, transform_indices = @transform_8, window_bounds = array<i64: 1, 128>}, {transform_indices = @transform_9, window_bounds = array<i64: 1, 8, 8>}, {transform_indices = @transform_10, window_bounds = array<i64: 1, 8, 128>}, {transform_indices = @transform_11, window_bounds = array<i64: 4, 1, 8, 8>}]} {
    %c0 = arith.constant 0 : index
    %c0_0 = arith.constant 0 : index
    %c0_1 = arith.constant 0 : index
    %0 = vector.load %arg1[%c0, %c0_0, %c0_1] : memref<1x8x32xf32, #tpu.memory_space<vmem>>, vector<1x8x32xf32>
    %1 = vector.shape_cast %0 : vector<1x8x32xf32> to vector<8x32xf32>
    %c0_2 = arith.constant 0 : index
    %c0_3 = arith.constant 0 : index
    %c0_4 = arith.constant 0 : index
    %2 = vector.load %arg2[%c0_2, %c0_3, %c0_4] : memref<1x8x32xf32, #tpu.memory_space<vmem>>, vector<1x8x32xf32>
    %3 = vector.shape_cast %2 : vector<1x8x32xf32> to vector<8x32xf32>
    %c0_5 = arith.constant 0 : index
    %c0_6 = arith.constant 0 : index
    %c0_7 = arith.constant 0 : index
    %4 = vector.load %arg3[%c0_5, %c0_6, %c0_7] : memref<1x8x32xf32, #tpu.memory_space<vmem>>, vector<1x8x32xf32>
    %5 = vector.shape_cast %4 : vector<1x8x32xf32> to vector<8x32xf32>
    %c0_8 = arith.constant 0 : index
    %c0_9 = arith.constant 0 : index
    %6 = vector.load %arg4[%c0_8, %c0_9] : memref<32x128xf32, #tpu.memory_space<vmem>>, vector<32x128xf32>
    %cst = arith.constant dense<0.000000e+00> : vector<8x128xf32>
    %7 = tpu.matmul %1, %6, %cst {dimension_numbers = #tpu.dot_dimension_numbers<[1], [0], [0], [1], [0, 0, 1, 1], [], []>} : vector<8x32xf32>, vector<32x128xf32>, vector<8x128xf32> -> vector<8x128xf32>
    %c0_10 = arith.constant 0 : index
    %c0_11 = arith.constant 0 : index
    %8 = vector.load %arg5[%c0_10, %c0_11] : memref<1x128xf32, #tpu.memory_space<vmem>>, vector<1x128xf32>
    %9 = vector.broadcast %8 : vector<1x128xf32> to vector<8x128xf32>
    %10 = arith.addf %7, %9 : vector<8x128xf32>
    %c0_12 = arith.constant 0 : index
    %c0_13 = arith.constant 0 : index
    %11 = vector.load %arg6[%c0_12, %c0_13] : memref<32x128xf32, #tpu.memory_space<vmem>>, vector<32x128xf32>
    %cst_14 = arith.constant dense<0.000000e+00> : vector<8x128xf32>
    %12 = tpu.matmul %3, %11, %cst_14 {dimension_numbers = #tpu.dot_dimension_numbers<[1], [0], [0], [1], [0, 0, 1, 1], [], []>} : vector<8x32xf32>, vector<32x128xf32>, vector<8x128xf32> -> vector<8x128xf32>
    %c0_15 = arith.constant 0 : index
    %c0_16 = arith.constant 0 : index
    %13 = vector.load %arg7[%c0_15, %c0_16] : memref<1x128xf32, #tpu.memory_space<vmem>>, vector<1x128xf32>
    %14 = vector.broadcast %13 : vector<1x128xf32> to vector<8x128xf32>
    %15 = arith.addf %12, %14 : vector<8x128xf32>
    %c0_17 = arith.constant 0 : index
    %c0_18 = arith.constant 0 : index
    %16 = vector.load %arg8[%c0_17, %c0_18] : memref<32x128xf32, #tpu.memory_space<vmem>>, vector<32x128xf32>
    %cst_19 = arith.constant dense<0.000000e+00> : vector<8x128xf32>
    %17 = tpu.matmul %5, %16, %cst_19 {dimension_numbers = #tpu.dot_dimension_numbers<[1], [0], [0], [1], [0, 0, 1, 1], [], []>} : vector<8x32xf32>, vector<32x128xf32>, vector<8x128xf32> -> vector<8x128xf32>
    %c0_20 = arith.constant 0 : index
    %c0_21 = arith.constant 0 : index
    %18 = vector.load %arg9[%c0_20, %c0_21] : memref<1x128xf32, #tpu.memory_space<vmem>>, vector<1x128xf32>
    %19 = vector.broadcast %18 : vector<1x128xf32> to vector<8x128xf32>
    %20 = arith.addf %17, %19 : vector<8x128xf32>
    %cst_22 = arith.constant 0.176776692 : f32
    %21 = vector.broadcast %cst_22 : f32 to vector<8x128xf32>
    %22 = arith.mulf %10, %21 : vector<8x128xf32>
    %c0_23 = arith.constant 0 : index
    %c0_24 = arith.constant 0 : index
    %c0_25 = arith.constant 0 : index
    %23 = vector.load %arg10[%c0_23, %c0_24, %c0_25] : memref<1x8x8xf32, #tpu.memory_space<vmem>>, vector<1x8x8xf32>
    %24 = vector.shape_cast %23 : vector<1x8x8xf32> to vector<8x8xf32>
    %25 = vector.extract_strided_slice %22 {offsets = [0, 0], sizes = [8, 32], strides = [1, 1]} : vector<8x128xf32> to vector<8x32xf32>
    %26 = vector.extract_strided_slice %15 {offsets = [0, 0], sizes = [8, 32], strides = [1, 1]} : vector<8x128xf32> to vector<8x32xf32>
    %27 = vector.extract_strided_slice %20 {offsets = [0, 0], sizes = [8, 32], strides = [1, 1]} : vector<8x128xf32> to vector<8x32xf32>
    %cst_26 = arith.constant dense<0.000000e+00> : vector<8x8xf32>
    %28 = tpu.matmul %25, %26, %cst_26 {dimension_numbers = #tpu.dot_dimension_numbers<[1], [1], [0], [0], [0, 0, 1, 0], [], []>} : vector<8x32xf32>, vector<8x32xf32>, vector<8x8xf32> -> vector<8x8xf32>
    %29 = arith.addf %28, %24 : vector<8x8xf32>
    %cst_27 = arith.constant dense<0xFF800000> : vector<8xf32>
    %30 = vector.multi_reduction <maximumf>, %29, %cst_27 [1] : vector<8x8xf32> to vector<8xf32>
    %31 = vector.shape_cast %30 : vector<8xf32> to vector<8x1xf32>
    %32 = vector.broadcast %31 : vector<8x1xf32> to vector<8x8xf32>
    %33 = arith.subf %29, %32 : vector<8x8xf32>
    %34 = math.exp %33 : vector<8x8xf32>
    %cst_28 = arith.constant dense<0.000000e+00> : vector<8xf32>
    %35 = vector.multi_reduction <add>, %34, %cst_28 [1] : vector<8x8xf32> to vector<8xf32>
    %36 = vector.shape_cast %35 : vector<8xf32> to vector<8x1xf32>
    %37 = tpu.reciprocal %36 {approx = true} : vector<8x1xf32> -> vector<8x1xf32>
    %38 = vector.broadcast %37 : vector<8x1xf32> to vector<8x8xf32>
    %39 = arith.mulf %34, %38 : vector<8x8xf32>
    %c0_29 = arith.constant 0 : index
    %c0_30 = arith.constant 0 : index
    %c0_31 = arith.constant 0 : index
    %c0_32 = arith.constant 0 : index
    %40 = vector.load %arg12[%c0_29, %c0_30, %c0_31, %c0_32] : memref<4x1x8x8xf32, #tpu.memory_space<vmem>>, vector<1x1x8x8xf32>
    %41 = vector.shape_cast %40 : vector<1x1x8x8xf32> to vector<8x8xf32>
    %42 = vector.shape_cast %39 : vector<8x8xf32> to vector<1x1x8x8xf32>
    tpu.vector_store %arg12[%c0_29, %c0_30, %c0_31, %c0_32], %42 {strides = array<i32>} : memref<4x1x8x8xf32, #tpu.memory_space<vmem>>, vector<1x1x8x8xf32>,
    %cst_33 = arith.constant dense<0.000000e+00> : vector<8x32xf32>
    %43 = tpu.matmul %39, %27, %cst_33 {dimension_numbers = #tpu.dot_dimension_numbers<[1], [0], [0], [1], [0, 0, 1, 1], [], []>} : vector<8x8xf32>, vector<8x32xf32>, vector<8x32xf32> -> vector<8x32xf32>
    %44 = vector.extract_strided_slice %22 {offsets = [0, 32], sizes = [8, 32], strides = [1, 1]} : vector<8x128xf32> to vector<8x32xf32>
    %45 = vector.extract_strided_slice %15 {offsets = [0, 32], sizes = [8, 32], strides = [1, 1]} : vector<8x128xf32> to vector<8x32xf32>
    %46 = vector.extract_strided_slice %20 {offsets = [0, 32], sizes = [8, 32], strides = [1, 1]} : vector<8x128xf32> to vector<8x32xf32>
    %cst_34 = arith.constant dense<0.000000e+00> : vector<8x8xf32>
    %47 = tpu.matmul %44, %45, %cst_34 {dimension_numbers = #tpu.dot_dimension_numbers<[1], [1], [0], [0], [0, 0, 1, 0], [], []>} : vector<8x32xf32>, vector<8x32xf32>, vector<8x8xf32> -> vector<8x8xf32>
    %48 = arith.addf %47, %24 : vector<8x8xf32>
    %cst_35 = arith.constant dense<0xFF800000> : vector<8xf32>
    %49 = vector.multi_reduction <maximumf>, %48, %cst_35 [1] : vector<8x8xf32> to vector<8xf32>
    %50 = vector.shape_cast %49 : vector<8xf32> to vector<8x1xf32>
    %51 = vector.broadcast %50 : vector<8x1xf32> to vector<8x8xf32>
    %52 = arith.subf %48, %51 : vector<8x8xf32>
    %53 = math.exp %52 : vector<8x8xf32>
    %cst_36 = arith.constant dense<0.000000e+00> : vector<8xf32>
    %54 = vector.multi_reduction <add>, %53, %cst_36 [1] : vector<8x8xf32> to vector<8xf32>
    %55 = vector.shape_cast %54 : vector<8xf32> to vector<8x1xf32>
    %56 = tpu.reciprocal %55 {approx = true} : vector<8x1xf32> -> vector<8x1xf32>
    %57 = vector.broadcast %56 : vector<8x1xf32> to vector<8x8xf32>
    %58 = arith.mulf %53, %57 : vector<8x8xf32>
    %c1 = arith.constant 1 : index
    %c0_37 = arith.constant 0 : index
    %c0_38 = arith.constant 0 : index
    %c0_39 = arith.constant 0 : index
    %59 = vector.load %arg12[%c1, %c0_37, %c0_38, %c0_39] : memref<4x1x8x8xf32, #tpu.memory_space<vmem>>, vector<1x1x8x8xf32>
    %60 = vector.shape_cast %59 : vector<1x1x8x8xf32> to vector<8x8xf32>
    %61 = vector.shape_cast %58 : vector<8x8xf32> to vector<1x1x8x8xf32>
    tpu.vector_store %arg12[%c1, %c0_37, %c0_38, %c0_39], %61 {strides = array<i32>} : memref<4x1x8x8xf32, #tpu.memory_space<vmem>>, vector<1x1x8x8xf32>,
    %cst_40 = arith.constant dense<0.000000e+00> : vector<8x32xf32>
    %62 = tpu.matmul %58, %46, %cst_40 {dimension_numbers = #tpu.dot_dimension_numbers<[1], [0], [0], [1], [0, 0, 1, 1], [], []>} : vector<8x8xf32>, vector<8x32xf32>, vector<8x32xf32> -> vector<8x32xf32>
    %63 = vector.extract_strided_slice %22 {offsets = [0, 64], sizes = [8, 32], strides = [1, 1]} : vector<8x128xf32> to vector<8x32xf32>
    %64 = vector.extract_strided_slice %15 {offsets = [0, 64], sizes = [8, 32], strides = [1, 1]} : vector<8x128xf32> to vector<8x32xf32>
    %65 = vector.extract_strided_slice %20 {offsets = [0, 64], sizes = [8, 32], strides = [1, 1]} : vector<8x128xf32> to vector<8x32xf32>
    %cst_41 = arith.constant dense<0.000000e+00> : vector<8x8xf32>
    %66 = tpu.matmul %63, %64, %cst_41 {dimension_numbers = #tpu.dot_dimension_numbers<[1], [1], [0], [0], [0, 0, 1, 0], [], []>} : vector<8x32xf32>, vector<8x32xf32>, vector<8x8xf32> -> vector<8x8xf32>
    %67 = arith.addf %66, %24 : vector<8x8xf32>
    %cst_42 = arith.constant dense<0xFF800000> : vector<8xf32>
    %68 = vector.multi_reduction <maximumf>, %67, %cst_42 [1] : vector<8x8xf32> to vector<8xf32>
    %69 = vector.shape_cast %68 : vector<8xf32> to vector<8x1xf32>
    %70 = vector.broadcast %69 : vector<8x1xf32> to vector<8x8xf32>
    %71 = arith.subf %67, %70 : vector<8x8xf32>
    %72 = math.exp %71 : vector<8x8xf32>
    %cst_43 = arith.constant dense<0.000000e+00> : vector<8xf32>
    %73 = vector.multi_reduction <add>, %72, %cst_43 [1] : vector<8x8xf32> to vector<8xf32>
    %74 = vector.shape_cast %73 : vector<8xf32> to vector<8x1xf32>
    %75 = tpu.reciprocal %74 {approx = true} : vector<8x1xf32> -> vector<8x1xf32>
    %76 = vector.broadcast %75 : vector<8x1xf32> to vector<8x8xf32>
    %77 = arith.mulf %72, %76 : vector<8x8xf32>
    %c2 = arith.constant 2 : index
    %c0_44 = arith.constant 0 : index
    %c0_45 = arith.constant 0 : index
    %c0_46 = arith.constant 0 : index
    %78 = vector.load %arg12[%c2, %c0_44, %c0_45, %c0_46] : memref<4x1x8x8xf32, #tpu.memory_space<vmem>>, vector<1x1x8x8xf32>
    %79 = vector.shape_cast %78 : vector<1x1x8x8xf32> to vector<8x8xf32>
    %80 = vector.shape_cast %77 : vector<8x8xf32> to vector<1x1x8x8xf32>
    tpu.vector_store %arg12[%c2, %c0_44, %c0_45, %c0_46], %80 {strides = array<i32>} : memref<4x1x8x8xf32, #tpu.memory_space<vmem>>, vector<1x1x8x8xf32>,
    %cst_47 = arith.constant dense<0.000000e+00> : vector<8x32xf32>
    %81 = tpu.matmul %77, %65, %cst_47 {dimension_numbers = #tpu.dot_dimension_numbers<[1], [0], [0], [1], [0, 0, 1, 1], [], []>} : vector<8x8xf32>, vector<8x32xf32>, vector<8x32xf32> -> vector<8x32xf32>
    %82 = vector.extract_strided_slice %22 {offsets = [0, 96], sizes = [8, 32], strides = [1, 1]} : vector<8x128xf32> to vector<8x32xf32>
    %83 = vector.extract_strided_slice %15 {offsets = [0, 96], sizes = [8, 32], strides = [1, 1]} : vector<8x128xf32> to vector<8x32xf32>
    %84 = vector.extract_strided_slice %20 {offsets = [0, 96], sizes = [8, 32], strides = [1, 1]} : vector<8x128xf32> to vector<8x32xf32>
    %cst_48 = arith.constant dense<0.000000e+00> : vector<8x8xf32>
    %85 = tpu.matmul %82, %83, %cst_48 {dimension_numbers = #tpu.dot_dimension_numbers<[1], [1], [0], [0], [0, 0, 1, 0], [], []>} : vector<8x32xf32>, vector<8x32xf32>, vector<8x8xf32> -> vector<8x8xf32>
    %86 = arith.addf %85, %24 : vector<8x8xf32>
    %cst_49 = arith.constant dense<0xFF800000> : vector<8xf32>
    %87 = vector.multi_reduction <maximumf>, %86, %cst_49 [1] : vector<8x8xf32> to vector<8xf32>
    %88 = vector.shape_cast %87 : vector<8xf32> to vector<8x1xf32>
    %89 = vector.broadcast %88 : vector<8x1xf32> to vector<8x8xf32>
    %90 = arith.subf %86, %89 : vector<8x8xf32>
    %91 = math.exp %90 : vector<8x8xf32>
    %cst_50 = arith.constant dense<0.000000e+00> : vector<8xf32>
    %92 = vector.multi_reduction <add>, %91, %cst_50 [1] : vector<8x8xf32> to vector<8xf32>
    %93 = vector.shape_cast %92 : vector<8xf32> to vector<8x1xf32>
    %94 = tpu.reciprocal %93 {approx = true} : vector<8x1xf32> -> vector<8x1xf32>
    %95 = vector.broadcast %94 : vector<8x1xf32> to vector<8x8xf32>
    %96 = arith.mulf %91, %95 : vector<8x8xf32>
    %c3 = arith.constant 3 : index
    %c0_51 = arith.constant 0 : index
    %c0_52 = arith.constant 0 : index
    %c0_53 = arith.constant 0 : index
    %97 = vector.load %arg12[%c3, %c0_51, %c0_52, %c0_53] : memref<4x1x8x8xf32, #tpu.memory_space<vmem>>, vector<1x1x8x8xf32>
    %98 = vector.shape_cast %97 : vector<1x1x8x8xf32> to vector<8x8xf32>
    %99 = vector.shape_cast %96 : vector<8x8xf32> to vector<1x1x8x8xf32>
    tpu.vector_store %arg12[%c3, %c0_51, %c0_52, %c0_53], %99 {strides = array<i32>} : memref<4x1x8x8xf32, #tpu.memory_space<vmem>>, vector<1x1x8x8xf32>,
    %cst_54 = arith.constant dense<0.000000e+00> : vector<8x32xf32>
    %100 = tpu.matmul %96, %84, %cst_54 {dimension_numbers = #tpu.dot_dimension_numbers<[1], [0], [0], [1], [0, 0, 1, 1], [], []>} : vector<8x8xf32>, vector<8x32xf32>, vector<8x32xf32> -> vector<8x32xf32>
    %101 = tpu.concatenate %43, %62, %81, %100 in 1 : vector<8x32xf32>, vector<8x32xf32>, vector<8x32xf32>, vector<8x32xf32> -> vector<8x128xf32>
    %c0_55 = arith.constant 0 : index
    %c0_56 = arith.constant 0 : index
    %c0_57 = arith.constant 0 : index
    %102 = vector.load %arg11[%c0_55, %c0_56, %c0_57] : memref<1x8x128xf32, #tpu.memory_space<vmem>>, vector<1x8x128xf32>
    %103 = vector.shape_cast %102 : vector<1x8x128xf32> to vector<8x128xf32>
    %104 = vector.shape_cast %101 : vector<8x128xf32> to vector<1x8x128xf32>
    tpu.vector_store %arg11[%c0_55, %c0_56, %c0_57], %104 {strides = array<i32>} : memref<1x8x128xf32, #tpu.memory_space<vmem>>, vector<1x8x128xf32>,
    return
  }
  func.func @transform_0(%arg0: i32) -> (i32, i32, i32) {
    %c0_i32 = arith.constant 0 : i32
    %c0_i32_0 = arith.constant 0 : i32
    %c0_i32_1 = arith.constant 0 : i32
    return %arg0, %c0_i32, %c0_i32_0 : i32, i32, i32
  }
  func.func @transform_1(%arg0: i32) -> (i32, i32, i32) {
    %c0_i32 = arith.constant 0 : i32
    %c0_i32_0 = arith.constant 0 : i32
    %c0_i32_1 = arith.constant 0 : i32
    return %arg0, %c0_i32, %c0_i32_0 : i32, i32, i32
  }
  func.func @transform_2(%arg0: i32) -> (i32, i32, i32) {
    %c0_i32 = arith.constant 0 : i32
    %c0_i32_0 = arith.constant 0 : i32
    %c0_i32_1 = arith.constant 0 : i32
    return %arg0, %c0_i32, %c0_i32_0 : i32, i32, i32
  }
  func.func @transform_3(%arg0: i32) -> (i32, i32) {
    %c0_i32 = arith.constant 0 : i32
    %c0_i32_0 = arith.constant 0 : i32
    %c0_i32_1 = arith.constant 0 : i32
    return %c0_i32, %c0_i32_0 : i32, i32
  }
  func.func @transform_4(%arg0: i32) -> (i32, i32) {
    %c0_i32 = arith.constant 0 : i32
    %c0_i32_0 = arith.constant 0 : i32
    %c0_i32_1 = arith.constant 0 : i32
    return %c0_i32, %c0_i32_0 : i32, i32
  }
  func.func @transform_5(%arg0: i32) -> (i32, i32) {
    %c0_i32 = arith.constant 0 : i32
    %c0_i32_0 = arith.constant 0 : i32
    %c0_i32_1 = arith.constant 0 : i32
    return %c0_i32, %c0_i32_0 : i32, i32
  }
  func.func @transform_6(%arg0: i32) -> (i32, i32) {
    %c0_i32 = arith.constant 0 : i32
    %c0_i32_0 = arith.constant 0 : i32
    %c0_i32_1 = arith.constant 0 : i32
    return %c0_i32, %c0_i32_0 : i32, i32
  }
  func.func @transform_7(%arg0: i32) -> (i32, i32) {
    %c0_i32 = arith.constant 0 : i32
    %c0_i32_0 = arith.constant 0 : i32
    %c0_i32_1 = arith.constant 0 : i32
    return %c0_i32, %c0_i32_0 : i32, i32
  }
  func.func @transform_8(%arg0: i32) -> (i32, i32) {
    %c0_i32 = arith.constant 0 : i32
    %c0_i32_0 = arith.constant 0 : i32
    %c0_i32_1 = arith.constant 0 : i32
    return %c0_i32, %c0_i32_0 : i32, i32
  }
  func.func @transform_9(%arg0: i32) -> (i32, i32, i32) {
    %c0_i32 = arith.constant 0 : i32
    %c0_i32_0 = arith.constant 0 : i32
    %c0_i32_1 = arith.constant 0 : i32
    return %arg0, %c0_i32, %c0_i32_0 : i32, i32, i32
  }
  func.func @transform_10(%arg0: i32) -> (i32, i32, i32) {
    %c0_i32 = arith.constant 0 : i32
    %c0_i32_0 = arith.constant 0 : i32
    %c0_i32_1 = arith.constant 0 : i32
    return %arg0, %c0_i32, %c0_i32_0 : i32, i32, i32
  }
  func.func @transform_11(%arg0: i32) -> (i32, i32, i32, i32) {
    %c0_i32 = arith.constant 0 : i32
    %c0_i32_0 = arith.constant 0 : i32
    %c0_i32_1 = arith.constant 0 : i32
    %c0_i32_2 = arith.constant 0 : i32
    return %c0_i32, %arg0, %c0_i32_0, %c0_i32_1 : i32, i32, i32, i32
  }
}

</mosaic_0001>

<llo_original>
// kernel: tpu_custom_call.1
$region0: #{tpu_custom_call.1}
  #allocation0 [shape = 'u32[]', space=smem, size = 0x4, offset = 0x4, fixed_abs, tag = 'smem constant byte address 0x4 - core index']
  #allocation1 [shape = 'u32[144,128]{1,0:T(1,128)}', space=vmem, size = 0x12000, scoped, tag = 'internal scratch']
  %s0 = inlined_call_operand.hbm [shape: f32[2,8,32], index: 0, kind: input, shape index: {}]
  %s1 = inlined_call_operand.hbm [shape: f32[2,8,32], index: 1, kind: input, shape index: {}]
  %s2 = inlined_call_operand.hbm [shape: f32[2,8,32], index: 2, kind: input, shape index: {}]
  %s3 = inlined_call_operand.hbm [shape: f32[32,128], index: 3, kind: input, shape index: {}]
  %s4 = inlined_call_operand.vmem [shape: f32[1,128], index: 4, kind: input, shape index: {}]
  %s5 = inlined_call_operand.hbm [shape: f32[32,128], index: 5, kind: input, shape index: {}]
  %s6 = inlined_call_operand.vmem [shape: f32[1,128], index: 6, kind: input, shape index: {}]
  %s7 = inlined_call_operand.hbm [shape: f32[32,128], index: 7, kind: input, shape index: {}]
  %s8 = inlined_call_operand.vmem [shape: f32[1,128], index: 8, kind: input, shape index: {}]
  %s9 = inlined_call_operand.vmem [shape: f32[2,8,8], index: 9, kind: input, shape index: {}]
  %s10 = inlined_call_operand.hbm [shape: f32[2,8,128], index: 10, kind: output, shape index: {0}]
  %s11 = inlined_call_operand.hbm [shape: f32[4,2,8,8], index: 11, kind: output, shape index: {1}]
  %12 = xla_tuple %s10, %s11
  %s13 = sld [smem:[#allocation0]]
  $region105: #{tpu_custom_call.1} parent=0
    _
  %s15 = ssub.s32 1, %s13
  %s16 = scalar_select 0, %s15, %s13
  $region1: #{tpu_custom_call.1} parent=0
    #allocation2 [shape = 'u8[8192]{0}', space=vmem, size = 0x2000, scoped, tag = 'input window, operand 0']
    #allocation3 [shape = 's32[2]{0}', space=sflag, size = 0x8, scoped, tag = 'scoped memory for tpu_custom_call.1']
    #allocation4 [shape = 's32[2]{0}', space=sflag, size = 0x8, scoped, tag = 'scoped memory for tpu_custom_call.1']
    #allocation5 [shape = 'u8[8192]{0}', space=vmem, size = 0x2000, scoped, tag = 'input window, operand 1']
    #allocation6 [shape = 's32[2]{0}', space=sflag, size = 0x8, scoped, tag = 'scoped memory for tpu_custom_call.1']
    #allocation7 [shape = 'u8[8192]{0}', space=vmem, size = 0x2000, scoped, tag = 'input window, operand 2']
    #allocation8 [shape = 'u8[16384]{0}', space=vmem, size = 0x4000, scoped, tag = 'input window, operand 3, single buffered']
    #allocation9 [shape = 's32[1]{0}', space=sflag, size = 0x4, scoped, tag = 'scoped memory for tpu_custom_call.1']
    #allocation10 [shape = 'u8[16384]{0}', space=vmem, size = 0x4000, scoped, tag = 'input window, operand 5, single buffered']
    #allocation11 [shape = 'u8[16384]{0}', space=vmem, size = 0x4000, scoped, tag = 'input window, operand 7, single buffered']
    #allocation12 [shape = 's32[1]{0}', space=sflag, size = 0x4, scoped, tag = 'scoped memory for tpu_custom_call.1']
    #allocation13 [shape = 'u8[8192]{0}', space=vmem, size = 0x2000, scoped, tag = 'output window, operand 0']
    #allocation14 [shape = 'u8[32768]{0}', space=vmem, size = 0x8000, scoped, tag = 'output window, operand 1']
    #allocation15 [shape = 's32[2]{0}', space=sflag, size = 0x8, scoped, tag = 'scoped memory for tpu_custom_call.1']
    %17 = vsyncpa [#allocation3], 0
    %s18 = scalar_lea.sflag [#allocation3], 1
    %19 = vsyncpa %s18, 0
    %20 = vsyncpa [#allocation6], 0
    %s21 = scalar_lea.sflag [#allocation6], 1
    %22 = vsyncpa %s21, 0
    %23 = vsyncpa [#allocation9], 0
    %24 = vsyncpa [#allocation12], 0
    %25 = vsyncpa [#allocation4], 0
    %s26 = scalar_lea.sflag [#allocation4], 1
    %27 = vsyncpa %s26, 0
    %28 = vsyncpa [#allocation15], 0
    %s29 = scalar_lea.sflag [#allocation15], 1
    %30 = vsyncpa %s29, 0
    loop: start=0, step=1, limit=4
    $region2: #{tpu_custom_call.1} parent=1 // loop_pre_header
      _
    $region3: #{tpu_custom_call.1} parent=1 // loop_header
      %s32 = sphi 0, %s36
      %p33 = scmp.ge.s32.totalorder %s32, 4
      %s42 = sphi 0, %s44
      %s45 = sphi 0, %s42
      %s46 = sphi 0, %s45
      %s62 = sphi 0, %s46
      %s68 = sphi 0, %s70
      %s71 = sphi 0, %s68
      %s72 = sphi 0, %s71
      %s88 = sphi 0, %s72
      %s94 = sphi 0, %s96
      %s97 = sphi 0, %s94
      %s98 = sphi 0, %s97
      %s114 = sphi 0, %s98
      %s118 = sphi 0, %s118
      %s120 = sphi 0, %s118
      %s121 = sphi 0, %s120
      %s135 = sphi 0, %s121
      %s139 = sphi 0, %s139
      %s141 = sphi 0, %s139
      %s142 = sphi 0, %s141
      %s156 = sphi 0, %s142
      %s160 = sphi 0, %s160
      %s162 = sphi 0, %s160
      %s163 = sphi 0, %s162
      %s177 = sphi 0, %s163
      %s181 = sphi 0, %s181
      %s183 = sphi 0, %s181
      %s184 = sphi 0, %s183
      %s198 = sphi 0, %s184
      %s202 = sphi 0, %s202
      %s204 = sphi 0, %s202
      %s205 = sphi 0, %s204
      %s219 = sphi 0, %s205
      %s223 = sphi 0, %s223
      %s225 = sphi 0, %s223
      %s226 = sphi 0, %s225
      %s240 = sphi 0, %s226
      %s246 = sphi 0, %s248
      %s249 = sphi 0, %s246
      %s250 = sphi 0, %s249
      %s266 = sphi 0, %s250
      %s272 = sphi 0, %s274
      %s275 = sphi 0, %s272
      %s276 = sphi 0, %s275
      %s292 = sphi 0, %s276
      %s298 = sphi 0, %s300
      %s301 = sphi 0, %s298
      %s302 = sphi 0, %s301
      %s318 = sphi 0, %s302
    $region4: #{tpu_custom_call.1} parent=1 // loop_header_branch
      %35 = sbr.rel (%p33) target = $region8
    $region5: #{tpu_custom_call.1} parent=1 // loop_body
      %s37 = ssub.s32 %s32, 1
      %s38 = ssub.s32 %s32, 2
      %s39 = sadd.s32 %s32, 1
      %s40 = ssub.s32 %s32, %s39
      %p41 = scmp.eq.s32.totalorder %s40, 0
      %s43 = sadd.s32 %s42, 1
      %s44 = scalar_select %p41, %s42, %s43
      %p47 = pneg %p41
      %p48 = scmp.eq.s32.totalorder %s32, 1
      %p49 = por %p47, %p48
      %p50 = scmp.ne.s32.totalorder %s42, %s45
      %p51 = scmp.eq.s32.totalorder %s32, 0
      %p52 = por %p50, %p51
      %p53 = scmp.ne.s32.totalorder %s42, %s45
      %p54 = scmp.eq.s32.totalorder %s37, 1
      %p55 = por %p53, %p54
      %p56 = scmp.ne.s32.totalorder %s45, %s46
      %p57 = scmp.eq.s32.totalorder %s37, 0
      %p58 = por %p56, %p57
      %p59 = scmp.ne.s32.totalorder %s45, %s46
      %p60 = scmp.eq.s32.totalorder %s38, 1
      %p61 = por %p59, %p60
      %p63 = scmp.ne.s32.totalorder %s46, %s62
      %p64 = scmp.eq.s32.totalorder %s38, 0
      %p65 = por %p63, %p64
      %s66 = ssub.s32 %s32, %s39
      %p67 = scmp.eq.s32.totalorder %s66, 0
      %s69 = sadd.s32 %s68, 1
      %s70 = scalar_select %p67, %s68, %s69
      %p73 = pneg %p67
      %p74 = scmp.eq.s32.totalorder %s32, 1
      %p75 = por %p73, %p74
      %p76 = scmp.ne.s32.totalorder %s68, %s71
      %p77 = scmp.eq.s32.totalorder %s32, 0
      %p78 = por %p76, %p77
      %p79 = scmp.ne.s32.totalorder %s68, %s71
      %p80 = scmp.eq.s32.totalorder %s37, 1
      %p81 = por %p79, %p80
      %p82 = scmp.ne.s32.totalorder %s71, %s72
      %p83 = scmp.eq.s32.totalorder %s37, 0
      %p84 = por %p82, %p83
      %p85 = scmp.ne.s32.totalorder %s71, %s72
      %p86 = scmp.eq.s32.totalorder %s38, 1
      %p87 = por %p85, %p86
      %p89 = scmp.ne.s32.totalorder %s72, %s88
      %p90 = scmp.eq.s32.totalorder %s38, 0
      %p91 = por %p89, %p90
      %s92 = ssub.s32 %s32, %s39
      %p93 = scmp.eq.s32.totalorder %s92, 0
      %s95 = sadd.s32 %s94, 1
      %s96 = scalar_select %p93, %s94, %s95
      %p99 = pneg %p93
      %p100 = scmp.eq.s32.totalorder %s32, 1
      %p101 = por %p99, %p100
      %p102 = scmp.ne.s32.totalorder %s94, %s97
      %p103 = scmp.eq.s32.totalorder %s32, 0
      %p104 = por %p102, %p103
      %p105 = scmp.ne.s32.totalorder %s94, %s97
      %p106 = scmp.eq.s32.totalorder %s37, 1
      %p107 = por %p105, %p106
      %p108 = scmp.ne.s32.totalorder %s97, %s98
      %p109 = scmp.eq.s32.totalorder %s37, 0
      %p110 = por %p108, %p109
      %p111 = scmp.ne.s32.totalorder %s97, %s98
      %p112 = scmp.eq.s32.totalorder %s38, 1
      %p113 = por %p111, %p112
      %p115 = scmp.ne.s32.totalorder %s98, %s114
      %p116 = scmp.eq.s32.totalorder %s38, 0
      %p117 = por %p115, %p116
      %s119 = sadd.s32 %s118, 1
      %p122 = scmp.eq.s32.totalorder %s32, 1
      %p123 = scmp.ne.s32.totalorder %s118, %s120
      %p124 = scmp.eq.s32.totalorder %s32, 0
      %p125 = por %p123, %p124
      %p126 = scmp.ne.s32.totalorder %s118, %s120
      %p127 = scmp.eq.s32.totalorder %s37, 1
      %p128 = por %p126, %p127
      %p129 = scmp.ne.s32.totalorder %s120, %s121
      %p130 = scmp.eq.s32.totalorder %s37, 0
      %p131 = por %p129, %p130
      %p132 = scmp.ne.s32.totalorder %s120, %s121
      %p133 = scmp.eq.s32.totalorder %s38, 1
      %p134 = por %p132, %p133
      %p136 = scmp.ne.s32.totalorder %s121, %s135
      %p137 = scmp.eq.s32.totalorder %s38, 0
      %p138 = por %p136, %p137
      %s140 = sadd.s32 %s139, 1
      %p143 = scmp.eq.s32.totalorder %s32, 1
      %p144 = scmp.ne.s32.totalorder %s139, %s141
      %p145 = scmp.eq.s32.totalorder %s32, 0
      %p146 = por %p144, %p145
      %p147 = scmp.ne.s32.totalorder %s139, %s141
      %p148 = scmp.eq.s32.totalorder %s37, 1
      %p149 = por %p147, %p148
      %p150 = scmp.ne.s32.totalorder %s141, %s142
      %p151 = scmp.eq.s32.totalorder %s37, 0
      %p152 = por %p150, %p151
      %p153 = scmp.ne.s32.totalorder %s141, %s142
      %p154 = scmp.eq.s32.totalorder %s38, 1
      %p155 = por %p153, %p154
      %p157 = scmp.ne.s32.totalorder %s142, %s156
      %p158 = scmp.eq.s32.totalorder %s38, 0
      %p159 = por %p157, %p158
      %s161 = sadd.s32 %s160, 1
      %p164 = scmp.eq.s32.totalorder %s32, 1
      %p165 = scmp.ne.s32.totalorder %s160, %s162
      %p166 = scmp.eq.s32.totalorder %s32, 0
      %p167 = por %p165, %p166
      %p168 = scmp.ne.s32.totalorder %s160, %s162
      %p169 = scmp.eq.s32.totalorder %s37, 1
      %p170 = por %p168, %p169
      %p171 = scmp.ne.s32.totalorder %s162, %s163
      %p172 = scmp.eq.s32.totalorder %s37, 0
      %p173 = por %p171, %p172
      %p174 = scmp.ne.s32.totalorder %s162, %s163
      %p175 = scmp.eq.s32.totalorder %s38, 1
      %p176 = por %p174, %p175
      %p178 = scmp.ne.s32.totalorder %s163, %s177
      %p179 = scmp.eq.s32.totalorder %s38, 0
      %p180 = por %p178, %p179
      %s182 = sadd.s32 %s181, 1
      %p185 = scmp.eq.s32.totalorder %s32, 1
      %p186 = scmp.ne.s32.totalorder %s181, %s183
      %p187 = scmp.eq.s32.totalorder %s32, 0
      %p188 = por %p186, %p187
      %p189 = scmp.ne.s32.totalorder %s181, %s183
      %p190 = scmp.eq.s32.totalorder %s37, 1
      %p191 = por %p189, %p190
      %p192 = scmp.ne.s32.totalorder %s183, %s184
      %p193 = scmp.eq.s32.totalorder %s37, 0
      %p194 = por %p192, %p193
      %p195 = scmp.ne.s32.totalorder %s183, %s184
      %p196 = scmp.eq.s32.totalorder %s38, 1
      %p197 = por %p195, %p196
      %p199 = scmp.ne.s32.totalorder %s184, %s198
      %p200 = scmp.eq.s32.totalorder %s38, 0
      %p201 = por %p199, %p200
      %s203 = sadd.s32 %s202, 1
      %p206 = scmp.eq.s32.totalorder %s32, 1
      %p207 = scmp.ne.s32.totalorder %s202, %s204
      %p208 = scmp.eq.s32.totalorder %s32, 0
      %p209 = por %p207, %p208
      %p210 = scmp.ne.s32.totalorder %s202, %s204
      %p211 = scmp.eq.s32.totalorder %s37, 1
      %p212 = por %p210, %p211
      %p213 = scmp.ne.s32.totalorder %s204, %s205
      %p214 = scmp.eq.s32.totalorder %s37, 0
      %p215 = por %p213, %p214
      %p216 = scmp.ne.s32.totalorder %s204, %s205
      %p217 = scmp.eq.s32.totalorder %s38, 1
      %p218 = por %p216, %p217
      %p220 = scmp.ne.s32.totalorder %s205, %s219
      %p221 = scmp.eq.s32.totalorder %s38, 0
      %p222 = por %p220, %p221
      %s224 = sadd.s32 %s223, 1
      %p227 = scmp.eq.s32.totalorder %s32, 1
      %p228 = scmp.ne.s32.totalorder %s223, %s225
      %p229 = scmp.eq.s32.totalorder %s32, 0
      %p230 = por %p228, %p229
      %p231 = scmp.ne.s32.totalorder %s223, %s225
      %p232 = scmp.eq.s32.totalorder %s37, 1
      %p233 = por %p231, %p232
      %p234 = scmp.ne.s32.totalorder %s225, %s226
      %p235 = scmp.eq.s32.totalorder %s37, 0
      %p236 = por %p234, %p235
      %p237 = scmp.ne.s32.totalorder %s225, %s226
      %p238 = scmp.eq.s32.totalorder %s38, 1
      %p239 = por %p237, %p238
      %p241 = scmp.ne.s32.totalorder %s226, %s240
      %p242 = scmp.eq.s32.totalorder %s38, 0
      %p243 = por %p241, %p242
      %s244 = ssub.s32 %s32, %s39
      %p245 = scmp.eq.s32.totalorder %s244, 0
      %s247 = sadd.s32 %s246, 1
      %s248 = scalar_select %p245, %s246, %s247
      %p251 = pneg %p245
      %p252 = scmp.eq.s32.totalorder %s32, 1
      %p253 = por %p251, %p252
      %p254 = scmp.ne.s32.totalorder %s246, %s249
      %p255 = scmp.eq.s32.totalorder %s32, 0
      %p256 = por %p254, %p255
      %p257 = scmp.ne.s32.totalorder %s246, %s249
      %p258 = scmp.eq.s32.totalorder %s37, 1
      %p259 = por %p257, %p258
      %p260 = scmp.ne.s32.totalorder %s249, %s250
      %p261 = scmp.eq.s32.totalorder %s37, 0
      %p262 = por %p260, %p261
      %p263 = scmp.ne.s32.totalorder %s249, %s250
      %p264 = scmp.eq.s32.totalorder %s38, 1
      %p265 = por %p263, %p264
      %p267 = scmp.ne.s32.totalorder %s250, %s266
      %p268 = scmp.eq.s32.totalorder %s38, 0
      %p269 = por %p267, %p268
      %s270 = ssub.s32 %s32, %s39
      %p271 = scmp.eq.s32.totalorder %s270, 0
      %s273 = sadd.s32 %s272, 1
      %s274 = scalar_select %p271, %s272, %s273
      %p277 = pneg %p271
      %p278 = scmp.eq.s32.totalorder %s32, 1
      %p279 = por %p277, %p278
      %p280 = scmp.ne.s32.totalorder %s272, %s275
      %p281 = scmp.eq.s32.totalorder %s32, 0
      %p282 = por %p280, %p281
      %p283 = scmp.ne.s32.totalorder %s272, %s275
      %p284 = scmp.eq.s32.totalorder %s37, 1
      %p285 = por %p283, %p284
      %p286 = scmp.ne.s32.totalorder %s275, %s276
      %p287 = scmp.eq.s32.totalorder %s37, 0
      %p288 = por %p286, %p287
      %p289 = scmp.ne.s32.totalorder %s275, %s276
      %p290 = scmp.eq.s32.totalorder %s38, 1
      %p291 = por %p289, %p290
      %p293 = scmp.ne.s32.totalorder %s276, %s292
      %p294 = scmp.eq.s32.totalorder %s38, 0
      %p295 = por %p293, %p294
      %s296 = ssub.s32 %s32, %s39
      %p297 = scmp.eq.s32.totalorder %s296, 0
      %s299 = sadd.s32 %s298, 1
      %s300 = scalar_select %p297, %s298, %s299
      %p303 = pneg %p297
      %p304 = scmp.eq.s32.totalorder %s32, 1
      %p305 = por %p303, %p304
      %p306 = scmp.ne.s32.totalorder %s298, %s301
      %p307 = scmp.eq.s32.totalorder %s32, 0
      %p308 = por %p306, %p307
      %p309 = scmp.ne.s32.totalorder %s298, %s301
      %p310 = scmp.eq.s32.totalorder %s37, 1
      %p311 = por %p309, %p310
      %p312 = scmp.ne.s32.totalorder %s301, %s302
      %p313 = scmp.eq.s32.totalorder %s37, 0
      %p314 = por %p312, %p313
      %p315 = scmp.ne.s32.totalorder %s301, %s302
      %p316 = scmp.eq.s32.totalorder %s38, 1
      %p317 = por %p315, %p316
      %p319 = scmp.ne.s32.totalorder %s302, %s318
      %p320 = scmp.eq.s32.totalorder %s38, 0
      %p321 = por %p319, %p320
      %p322 = scmp.le.s32.totalorder 1, %s32
      %p323 = scmp.lt.s32.totalorder %s32, 3
      %p324 = pnand %p322, %p323
      %p325 = pneg %p324
      // Predicated region
      $region9: #{tpu_custom_call.1} parent=5 // pred_check
        _
      $region10: #{tpu_custom_call.1} parent=5 // pred_check_branch
        %327 = sbr.rel (%p324) target = $region12
      $region11: #{tpu_custom_call.1} parent=5 // pred_region
        %s328 = ssub.s32 %s32, 1
        // Predicated region
        $region13: #{tpu_custom_call.1} parent=11 // pred_check
          %p329 = pneg %p131
        $region14: #{tpu_custom_call.1} parent=11 // pred_check_branch
          %331 = sbr.rel (%p329) target = $region16
        $region15: #{tpu_custom_call.1} parent=11 // pred_region
          %s333 = ssub.s32 512, 512
          %334 = vsyncadd [#allocation9], %s333
          %s335 = sshll.u32 [#allocation8], 4
          %s336 = int_to_ptr.vmem [resolvable:$true] %s335
          %341 = dma.hbm_to_vmem [thread:$0]  %s3, 512, %s336, [#allocation9], 128, 128, 8
        $region16: #{tpu_custom_call.1} parent=11 // pred_fallthru
          _
        // Predicated region
        $region17: #{tpu_custom_call.1} parent=11 // pred_check
          %p342 = pneg %p152
        $region18: #{tpu_custom_call.1} parent=11 // pred_check_branch
          %344 = sbr.rel (%p342) target = $region20
        $region19: #{tpu_custom_call.1} parent=11 // pred_region
          _
        $region20: #{tpu_custom_call.1} parent=11 // pred_fallthru
          _
        // Predicated region
        $region21: #{tpu_custom_call.1} parent=11 // pred_check
          %p345 = pneg %p173
        $region22: #{tpu_custom_call.1} parent=11 // pred_check_branch
          %347 = sbr.rel (%p345) target = $region24
        $region23: #{tpu_custom_call.1} parent=11 // pred_region
          %s349 = ssub.s32 512, 512
          %350 = vsyncadd [#allocation9], %s349
          %s351 = sshll.u32 [#allocation10], 4
          %s352 = int_to_ptr.vmem [resolvable:$true] %s351
          %357 = dma.hbm_to_vmem [thread:$0]  %s5, 512, %s352, [#allocation9], 128, 128, 8
        $region24: #{tpu_custom_call.1} parent=11 // pred_fallthru
          _
        // Predicated region
        $region25: #{tpu_custom_call.1} parent=11 // pred_check
          %p358 = pneg %p194
        $region26: #{tpu_custom_call.1} parent=11 // pred_check_branch
          %360 = sbr.rel (%p358) target = $region28
        $region27: #{tpu_custom_call.1} parent=11 // pred_region
          _
        $region28: #{tpu_custom_call.1} parent=11 // pred_fallthru
          _
        // Predicated region
        $region29: #{tpu_custom_call.1} parent=11 // pred_check
          %p361 = pneg %p215
        $region30: #{tpu_custom_call.1} parent=11 // pred_check_branch
          %363 = sbr.rel (%p361) target = $region32
        $region31: #{tpu_custom_call.1} parent=11 // pred_region
          %s365 = ssub.s32 512, 512
          %366 = vsyncadd [#allocation12], %s365
          %s367 = sshll.u32 [#allocation11], 4
          %s368 = int_to_ptr.vmem [resolvable:$true] %s367
          %373 = dma.hbm_to_vmem [thread:$0]  %s7, 512, %s368, [#allocation12], 128, 128, 8
        $region32: #{tpu_custom_call.1} parent=11 // pred_fallthru
          _
        // Predicated region
        $region33: #{tpu_custom_call.1} parent=11 // pred_check
          %p374 = pneg %p236
        $region34: #{tpu_custom_call.1} parent=11 // pred_check_branch
          %376 = sbr.rel (%p374) target = $region36
        $region35: #{tpu_custom_call.1} parent=11 // pred_region
          _
        $region36: #{tpu_custom_call.1} parent=11 // pred_fallthru
          _
      $region12: #{tpu_custom_call.1} parent=5 // pred_fallthru
        _
      %p377 = scmp.lt.s32.totalorder %s32, 2
      // Predicated region
      $region37: #{tpu_custom_call.1} parent=5 // pred_check
        %p378 = pneg %p377
      $region38: #{tpu_custom_call.1} parent=5 // pred_check_branch
        %380 = sbr.rel (%p378) target = $region40
      $region39: #{tpu_custom_call.1} parent=5 // pred_region
        // Predicated region
        $region41: #{tpu_custom_call.1} parent=39 // pred_check
          %p381 = pneg %p52
        $region42: #{tpu_custom_call.1} parent=39 // pred_check_branch
          %383 = sbr.rel (%p381) target = $region44
        $region43: #{tpu_custom_call.1} parent=39 // pred_region
          %s384 = sand.u32 %s42, 1
          %s385 = scalar_lea.sflag [#allocation3], %s384
          %s386 = sand.u32 %s42, 1
          %s387 = smul.addr %s386, 8
          %s388 = scalar_lea.vmem [#allocation2], %s387
          %s390 = ssub.s32 128, 128
          %391 = vsyncadd %s385, %s390
          %s392 = smul.addr %s32, 128
          %s393 = scalar_lea.hbm %s0, %s392
          %s395 = sshll.u32 %s388, 4
          %s396 = int_to_ptr.vmem [resolvable:$true] %s395
          %398 = dma.hbm_to_vmem [thread:$0]  %s393, 128, %s396, %s385
        $region44: #{tpu_custom_call.1} parent=39 // pred_fallthru
          _
        // Predicated region
        $region45: #{tpu_custom_call.1} parent=39 // pred_check
          %p399 = pneg %p78
        $region46: #{tpu_custom_call.1} parent=39 // pred_check_branch
          %401 = sbr.rel (%p399) target = $region48
        $region47: #{tpu_custom_call.1} parent=39 // pred_region
          %s402 = sand.u32 %s32, 1
          %s403 = scalar_lea.sflag [#allocation6], %s402
          %s404 = sand.u32 %s68, 1
          %s405 = smul.addr %s404, 8
          %s406 = scalar_lea.vmem [#allocation5], %s405
          %s408 = ssub.s32 128, 128
          %409 = vsyncadd %s403, %s408
          %s410 = smul.addr %s32, 128
          %s411 = scalar_lea.hbm %s1, %s410
          %s413 = sshll.u32 %s406, 4
          %s414 = int_to_ptr.vmem [resolvable:$true] %s413
          %416 = dma.hbm_to_vmem [thread:$0]  %s411, 128, %s414, %s403
        $region48: #{tpu_custom_call.1} parent=39 // pred_fallthru
          _
        // Predicated region
        $region49: #{tpu_custom_call.1} parent=39 // pred_check
          %p417 = pneg %p104
        $region50: #{tpu_custom_call.1} parent=39 // pred_check_branch
          %419 = sbr.rel (%p417) target = $region52
        $region51: #{tpu_custom_call.1} parent=39 // pred_region
          %s420 = sand.u32 %s32, 1
          %s421 = scalar_lea.sflag [#allocation6], %s420
          %s422 = sand.u32 %s94, 1
          %s423 = smul.addr %s422, 8
          %s424 = scalar_lea.vmem [#allocation7], %s423
          %s426 = ssub.s32 128, 128
          %427 = vsyncadd %s421, %s426
          %s428 = smul.addr %s32, 128
          %s429 = scalar_lea.hbm %s2, %s428
          %s431 = sshll.u32 %s424, 4
          %s432 = int_to_ptr.vmem [resolvable:$true] %s431
          %434 = dma.hbm_to_vmem [thread:$0]  %s429, 128, %s432, %s421
        $region52: #{tpu_custom_call.1} parent=39 // pred_fallthru
          _
        // Predicated region
        $region53: #{tpu_custom_call.1} parent=39 // pred_check
          %p435 = pneg %p256
        $region54: #{tpu_custom_call.1} parent=39 // pred_check_branch
          %437 = sbr.rel (%p435) target = $region56
        $region55: #{tpu_custom_call.1} parent=39 // pred_region
          %p438 = scmp.lt.s32.totalorder %s32, 1
          %s439 = scalar_select %p438, %s32, 1
          %s440 = smul.addr %s439, 8
          %s441 = scalar_lea.vmem %s9, %s440
        $region56: #{tpu_custom_call.1} parent=39 // pred_fallthru
          _
      $region40: #{tpu_custom_call.1} parent=5 // pred_fallthru
        _
      %p442 = scmp.le.s32.totalorder 1, %s32
      %p443 = scmp.lt.s32.totalorder %s32, 3
      %p444 = pnand %p442, %p443
      %p445 = pneg %p444
      // Predicated region
      $region57: #{tpu_custom_call.1} parent=5 // pred_check
        _
      $region58: #{tpu_custom_call.1} parent=5 // pred_check_branch
        %447 = sbr.rel (%p444) target = $region60
      $region59: #{tpu_custom_call.1} parent=5 // pred_region
        %s448 = ssub.s32 %s32, 1
        %s449 = sand.u32 %s45, 1
        %s450 = scalar_lea.sflag [#allocation3], %s449
        %s451 = sand.u32 %s45, 1
        %s452 = smul.addr %s451, 8
        %s453 = scalar_lea.vmem [#allocation2], %s452
        // Predicated region
        $region61: #{tpu_custom_call.1} parent=59 // pred_check
          %p454 = pneg %p58
        $region62: #{tpu_custom_call.1} parent=59 // pred_check_branch
          %456 = sbr.rel (%p454) target = $region64
        $region63: #{tpu_custom_call.1} parent=59 // pred_region
          %457 = dma.done %s450, 128
        $region64: #{tpu_custom_call.1} parent=59 // pred_fallthru
          _
        %s458 = sand.u32 %s37, 1
        %s459 = scalar_lea.sflag [#allocation6], %s458
        %s460 = sand.u32 %s71, 1
        %s461 = smul.addr %s460, 8
        %s462 = scalar_lea.vmem [#allocation5], %s461
        // Predicated region
        $region65: #{tpu_custom_call.1} parent=59 // pred_check
          %p463 = pneg %p84
        $region66: #{tpu_custom_call.1} parent=59 // pred_check_branch
          %465 = sbr.rel (%p463) target = $region68
        $region67: #{tpu_custom_call.1} parent=59 // pred_region
          %466 = dma.done %s459, 128
        $region68: #{tpu_custom_call.1} parent=59 // pred_fallthru
          _
        %s467 = sand.u32 %s37, 1
        %s468 = scalar_lea.sflag [#allocation6], %s467
        %s469 = sand.u32 %s97, 1
        %s470 = smul.addr %s469, 8
        %s471 = scalar_lea.vmem [#allocation7], %s470
        // Predicated region
        $region69: #{tpu_custom_call.1} parent=59 // pred_check
          %p472 = pneg %p110
        $region70: #{tpu_custom_call.1} parent=59 // pred_check_branch
          %474 = sbr.rel (%p472) target = $region72
        $region71: #{tpu_custom_call.1} parent=59 // pred_region
          %475 = dma.done %s468, 128
        $region72: #{tpu_custom_call.1} parent=59 // pred_fallthru
          _
        // Predicated region
        $region73: #{tpu_custom_call.1} parent=59 // pred_check
          %p476 = pneg %p131
        $region74: #{tpu_custom_call.1} parent=59 // pred_check_branch
          %478 = sbr.rel (%p476) target = $region76
        $region75: #{tpu_custom_call.1} parent=59 // pred_region
          %479 = dma.done [#allocation9], 512
        $region76: #{tpu_custom_call.1} parent=59 // pred_fallthru
          _
        // Predicated region
        $region77: #{tpu_custom_call.1} parent=59 // pred_check
          %p480 = pneg %p173
        $region78: #{tpu_custom_call.1} parent=59 // pred_check_branch
          %482 = sbr.rel (%p480) target = $region80
        $region79: #{tpu_custom_call.1} parent=59 // pred_region
          %483 = dma.done [#allocation9], 512
        $region80: #{tpu_custom_call.1} parent=59 // pred_fallthru
          _
        // Predicated region
        $region81: #{tpu_custom_call.1} parent=59 // pred_check
          %p484 = pneg %p215
        $region82: #{tpu_custom_call.1} parent=59 // pred_check_branch
          %486 = sbr.rel (%p484) target = $region84
        $region83: #{tpu_custom_call.1} parent=59 // pred_region
          %487 = dma.done [#allocation12], 512
        $region84: #{tpu_custom_call.1} parent=59 // pred_fallthru
          _
        %s488 = sand.u32 %s45, 1
        %s489 = scalar_lea.sflag [#allocation3], %s488
        %s490 = sand.u32 %s45, 1
        %s491 = smul.addr %s490, 8
        %s492 = scalar_lea.vmem [#allocation2], %s491
        %p493 = pneg %p58
        %p494 = pneg %p55
        %s495 = sand.u32 %s37, 1
        %s496 = scalar_lea.sflag [#allocation6], %s495
        %s497 = sand.u32 %s71, 1
        %s498 = smul.addr %s497, 8
        %s499 = scalar_lea.vmem [#allocation5], %s498
        %p500 = pneg %p84
        %p501 = pneg %p81
        %s502 = sand.u32 %s37, 1
        %s503 = scalar_lea.sflag [#allocation6], %s502
        %s504 = sand.u32 %s97, 1
        %s505 = smul.addr %s504, 8
        %s506 = scalar_lea.vmem [#allocation7], %s505
        %p507 = pneg %p110
        %p508 = pneg %p107
        %p509 = pneg %p131
        %p510 = pneg %p128
        %p511 = pneg %p152
        %p512 = pneg %p149
        %p513 = pneg %p173
        %p514 = pneg %p170
        %p515 = pneg %p194
        %p516 = pneg %p191
        %p517 = pneg %p215
        %p518 = pneg %p212
        %p519 = pneg %p236
        %p520 = pneg %p233
        %p521 = scmp.lt.s32.totalorder %s37, 1
        %s522 = scalar_select %p521, %s37, 1
        %s523 = smul.addr %s522, 8
        %s524 = scalar_lea.vmem %s9, %s523
        %p525 = pneg %p262
        %p526 = pneg %p259
        %p527 = pneg %p288
        %p528 = pneg %p285
        %s529 = sand.u32 %s275, 1
        %s530 = scalar_lea.sflag [#allocation4], %s529
        %s531 = sand.u32 %s275, 1
        %s532 = smul.addr %s531, 8
        %s533 = scalar_lea.vmem [#allocation13], %s532
        %p534 = pneg %p314
        %p535 = pneg %p311
        %s536 = sand.u32 %s301, 1
        %s537 = scalar_lea.sflag [#allocation15], %s536
        %s538 = sand.u32 %s301, 1
        %s539 = smul.addr %s538, 32
        %s540 = scalar_lea.vmem [#allocation14], %s539
        %p541 = scmp.lt.s32.totalorder %s37, 1
        %s542 = scalar_select %p541, %s37, 1
        %s543 = smul.addr %s542, 8
        %s544 = scalar_lea.vmem %s9, %s543
        %v545 = vld [vmem:[%s453] sm:$0xff]
        %v546 = vld [vmem:[%s462] sm:$0xff]
        %v547 = vld [vmem:[%s471] sm:$0xff]
        %v548 = vld [vmem:[#allocation8] sm:$0xff]
        %v549 = vld [vmem:[#allocation8 + $0x8] sm:$0xff]
        %v550 = vld [vmem:[#allocation8 + $0x10] sm:$0xff]
        %v551 = vld [vmem:[#allocation8 + $0x18] sm:$0xff]
        %v552 = vld [vmem:[%s4] sm:$0x1]
        %v554 = vlaneseq
        %v555 = vshrl.u32 %v554, 7
        %v556 = vsub.s32 0, %v555
        %v557 = vrot.slane %v552, %v556
        %vm559 = vcmask 261120
        %v561 = vsel %vm559, %v545, 0
        %563 = vmatprep.subr.mxu0 0.0
        %564 = vmatpush1.msra.mxu0 %v548
        %565 = vmatprep.subr.mxu0 0.0
        %566 = vmatpush1.msra.mxu0 %v549
        %567 = vmatprep.subr.mxu0 0.0
        %568 = vmatpush1.msra.mxu0 %v550
        %569 = vmatprep.subr.mxu0 0.0
        %570 = vmatpush1.msra.mxu0 %v551
        %571 = vmatprep.subr.mxu0 0.0
        %572 = vmatpush1.msra.mxu0 0.0
        %573 = vmatprep.subr.mxu0 0.0
        %574 = vmatpush1.msra.mxu0 0.0
        %575 = vmatprep.subr.mxu0 0.0
        %576 = vmatpush1.msra.mxu0 0.0
        %577 = vmatprep.subr.mxu0 0.0
        %578 = vmatpush1.msra.mxu0 0.0
        %579 = vmatprep.subr.mxu0 0.0
        %580 = vmatpush1.msra.mxu0 0.0
        %581 = vmatprep.subr.mxu0 0.0
        %582 = vmatpush1.msra.mxu0 0.0
        %583 = vmatprep.subr.mxu0 0.0
        %584 = vmatpush1.msra.mxu0 0.0
        %585 = vmatprep.subr.mxu0 0.0
        %586 = vmatpush1.msra.mxu0 0.0
        %587 = vmatprep.subr.mxu0 0.0
        %588 = vmatpush1.msra.mxu0 0.0
        %589 = vmatprep.subr.mxu0 0.0
        %590 = vmatpush1.msra.mxu0 0.0
        %591 = vmatprep.subr.mxu0 0.0
        %592 = vmatpush1.msra.mxu0 0.0
        %593 = vmatprep.subr.mxu0 0.0
        %594 = vmatpush1.msra.mxu0 0.0
        %595 = vmatprep.subr.mxu0 0.0
        %596 = vmatpush1.msra.mxu0 0.0
        %597 = vmatprep.subr.mxu0 0.0
        %598 = vmatpush1.msra.mxu0 0.0
        %599 = vmatprep.subr.mxu0 0.0
        %600 = vmatpush1.msra.mxu0 0.0
        %601 = vmatprep.subr.mxu0 0.0
        %602 = vmatpush1.msra.mxu0 0.0
        %603 = vmatprep.subr.mxu0 0.0
        %604 = vmatpush1.msra.mxu0 0.0
        %605 = vmatprep.subr.mxu0 0.0
        %606 = vmatpush1.msra.mxu0 0.0
        %607 = vmatprep.subr.mxu0 0.0
        %608 = vmatpush1.msra.mxu0 0.0
        %609 = vmatprep.subr.mxu0 0.0
        %610 = vmatpush1.msra.mxu0 0.0
        %611 = vmatprep.subr.mxu0 0.0
        %612 = vmatpush1.msra.mxu0 0.0
        %613 = vmatprep.subr.mxu0 0.0
        %614 = vmatpush1.msra.mxu0 0.0
        %615 = vmatprep.subr.mxu0 0.0
        %616 = vmatpush1.msra.mxu0 0.0
        %617 = vmatprep.subr.mxu0 0.0
        %618 = vmatpush1.msra.mxu0 0.0
        %619 = vmatprep.subr.mxu0 0.0
        %620 = vmatpush1.msra.mxu0 0.0
        %621 = vmatprep.subr.mxu0 0.0
        %622 = vmatpush1.msra.mxu0 0.0
        %623 = vmatprep.subr.mxu0 0.0
        %624 = vmatpush1.msra.mxu0 0.0
        %625 = vmatprep.subr.mxu0 0.0
        %626 = vmatpush1.msra.mxu0 0.0
        %627 = vmatprep.mubr.f32.mxu0 0.0
        %628 = vmatmul.mubr.f32.gmra.mrb[0].mxu0 %v561
        %v629 = vpop.f32.mrb[0].mxu0
        %v630 = vadd.f32 %v557, %v629
        %v631 = vpop.f32.mrb[0].mxu0
        %632 = vdwg.mxu0
        %v633 = vld [vmem:[#allocation10] sm:$0xff]
        %v634 = vld [vmem:[#allocation10 + $0x8] sm:$0xff]
        %v635 = vld [vmem:[#allocation10 + $0x10] sm:$0xff]
        %v636 = vld [vmem:[#allocation10 + $0x18] sm:$0xff]
        %v637 = vld [vmem:[%s6] sm:$0x1]
        %v639 = vlaneseq
        %v640 = vshrl.u32 %v639, 7
        %v641 = vsub.s32 0, %v640
        %v642 = vrot.slane %v637, %v641
        %v645 = vsel %vm559, %v546, 0
        %647 = vmatprep.subr.mxu0 0.0
        %648 = vmatpush1.msra.mxu0 %v633
        %649 = vmatprep.subr.mxu0 0.0
        %650 = vmatpush1.msra.mxu0 %v634
        %651 = vmatprep.subr.mxu0 0.0
        %652 = vmatpush1.msra.mxu0 %v635
        %653 = vmatprep.subr.mxu0 0.0
        %654 = vmatpush1.msra.mxu0 %v636
        %655 = vmatprep.subr.mxu0 0.0
        %656 = vmatpush1.msra.mxu0 0.0
        %657 = vmatprep.subr.mxu0 0.0
        %658 = vmatpush1.msra.mxu0 0.0
        %659 = vmatprep.subr.mxu0 0.0
        %660 = vmatpush1.msra.mxu0 0.0
        %661 = vmatprep.subr.mxu0 0.0
        %662 = vmatpush1.msra.mxu0 0.0
        %663 = vmatprep.subr.mxu0 0.0
        %664 = vmatpush1.msra.mxu0 0.0
        %665 = vmatprep.subr.mxu0 0.0
        %666 = vmatpush1.msra.mxu0 0.0
        %667 = vmatprep.subr.mxu0 0.0
        %668 = vmatpush1.msra.mxu0 0.0
        %669 = vmatprep.subr.mxu0 0.0
        %670 = vmatpush1.msra.mxu0 0.0
        %671 = vmatprep.subr.mxu0 0.0
        %672 = vmatpush1.msra.mxu0 0.0
        %673 = vmatprep.subr.mxu0 0.0
        %674 = vmatpush1.msra.mxu0 0.0
        %675 = vmatprep.subr.mxu0 0.0
        %676 = vmatpush1.msra.mxu0 0.0
        %677 = vmatprep.subr.mxu0 0.0
        %678 = vmatpush1.msra.mxu0 0.0
        %679 = vmatprep.subr.mxu0 0.0
        %680 = vmatpush1.msra.mxu0 0.0
        %681 = vmatprep.subr.mxu0 0.0
        %682 = vmatpush1.msra.mxu0 0.0
        %683 = vmatprep.subr.mxu0 0.0
        %684 = vmatpush1.msra.mxu0 0.0
        %685 = vmatprep.subr.mxu0 0.0
        %686 = vmatpush1.msra.mxu0 0.0
        %687 = vmatprep.subr.mxu0 0.0
        %688 = vmatpush1.msra.mxu0 0.0
        %689 = vmatprep.subr.mxu0 0.0
        %690 = vmatpush1.msra.mxu0 0.0
        %691 = vmatprep.subr.mxu0 0.0
        %692 = vmatpush1.msra.mxu0 0.0
        %693 = vmatprep.subr.mxu0 0.0
        %694 = vmatpush1.msra.mxu0 0.0
        %695 = vmatprep.subr.mxu0 0.0
        %696 = vmatpush1.msra.mxu0 0.0
        %697 = vmatprep.subr.mxu0 0.0
        %698 = vmatpush1.msra.mxu0 0.0
        %699 = vmatprep.subr.mxu0 0.0
        %700 = vmatpush1.msra.mxu0 0.0
        %701 = vmatprep.subr.mxu0 0.0
        %702 = vmatpush1.msra.mxu0 0.0
        %703 = vmatprep.subr.mxu0 0.0
        %704 = vmatpush1.msra.mxu0 0.0
        %705 = vmatprep.subr.mxu0 0.0
        %706 = vmatpush1.msra.mxu0 0.0
        %707 = vmatprep.subr.mxu0 0.0
        %708 = vmatpush1.msra.mxu0 0.0
        %709 = vmatprep.subr.mxu0 0.0
        %710 = vmatpush1.msra.mxu0 0.0
        %711 = vmatprep.mubr.f32.mxu0 0.0
        %712 = vmatmul.mubr.f32.gmra.mrb[0].mxu0 %v645
        %v713 = vpop.f32.mrb[0].mxu0
        %v714 = vadd.f32 %v642, %v713
        %v715 = vpop.f32.mrb[0].mxu0
        %716 = vdwg.mxu0
        %v717 = vld [vmem:[#allocation11] sm:$0xff]
        %v718 = vld [vmem:[#allocation11 + $0x8] sm:$0xff]
        %v719 = vld [vmem:[#allocation11 + $0x10] sm:$0xff]
        %v720 = vld [vmem:[#allocation11 + $0x18] sm:$0xff]
        %v721 = vld [vmem:[%s8] sm:$0x1]
        %v723 = vlaneseq
        %v724 = vshrl.u32 %v723, 7
        %v725 = vsub.s32 0, %v724
        %v726 = vrot.slane %v721, %v725
        %v729 = vsel %vm559, %v547, 0
        %731 = vmatprep.subr.mxu0 0.0
        %732 = vmatpush1.msra.mxu0 %v717
        %733 = vmatprep.subr.mxu0 0.0
        %734 = vmatpush1.msra.mxu0 %v718
        %735 = vmatprep.subr.mxu0 0.0
        %736 = vmatpush1.msra.mxu0 %v719
        %737 = vmatprep.subr.mxu0 0.0
        %738 = vmatpush1.msra.mxu0 %v720
        %739 = vmatprep.subr.mxu0 0.0
        %740 = vmatpush1.msra.mxu0 0.0
        %741 = vmatprep.subr.mxu0 0.0
        %742 = vmatpush1.msra.mxu0 0.0
        %743 = vmatprep.subr.mxu0 0.0
        %744 = vmatpush1.msra.mxu0 0.0
        %745 = vmatprep.subr.mxu0 0.0
        %746 = vmatpush1.msra.mxu0 0.0
        %747 = vmatprep.subr.mxu0 0.0
        %748 = vmatpush1.msra.mxu0 0.0
        %749 = vmatprep.subr.mxu0 0.0
        %750 = vmatpush1.msra.mxu0 0.0
        %751 = vmatprep.subr.mxu0 0.0
        %752 = vmatpush1.msra.mxu0 0.0
        %753 = vmatprep.subr.mxu0 0.0
        %754 = vmatpush1.msra.mxu0 0.0
        %755 = vmatprep.subr.mxu0 0.0
        %756 = vmatpush1.msra.mxu0 0.0
        %757 = vmatprep.subr.mxu0 0.0
        %758 = vmatpush1.msra.mxu0 0.0
        %759 = vmatprep.subr.mxu0 0.0
        %760 = vmatpush1.msra.mxu0 0.0
        %761 = vmatprep.subr.mxu0 0.0
        %762 = vmatpush1.msra.mxu0 0.0
        %763 = vmatprep.subr.mxu0 0.0
        %764 = vmatpush1.msra.mxu0 0.0
        %765 = vmatprep.subr.mxu0 0.0
        %766 = vmatpush1.msra.mxu0 0.0
        %767 = vmatprep.subr.mxu0 0.0
        %768 = vmatpush1.msra.mxu0 0.0
        %769 = vmatprep.subr.mxu0 0.0
        %770 = vmatpush1.msra.mxu0 0.0
        %771 = vmatprep.subr.mxu0 0.0
        %772 = vmatpush1.msra.mxu0 0.0
        %773 = vmatprep.subr.mxu0 0.0
        %774 = vmatpush1.msra.mxu0 0.0
        %775 = vmatprep.subr.mxu0 0.0
        %776 = vmatpush1.msra.mxu0 0.0
        %777 = vmatprep.subr.mxu0 0.0
        %778 = vmatpush1.msra.mxu0 0.0
        %779 = vmatprep.subr.mxu0 0.0
        %780 = vmatpush1.msra.mxu0 0.0
        %781 = vmatprep.subr.mxu0 0.0
        %782 = vmatpush1.msra.mxu0 0.0
        %783 = vmatprep.subr.mxu0 0.0
        %784 = vmatpush1.msra.mxu0 0.0
        %785 = vmatprep.subr.mxu0 0.0
        %786 = vmatpush1.msra.mxu0 0.0
        %787 = vmatprep.subr.mxu0 0.0
        %788 = vmatpush1.msra.mxu0 0.0
        %789 = vmatprep.subr.mxu0 0.0
        %790 = vmatpush1.msra.mxu0 0.0
        %791 = vmatprep.subr.mxu0 0.0
        %792 = vmatpush1.msra.mxu0 0.0
        %793 = vmatprep.subr.mxu0 0.0
        %794 = vmatpush1.msra.mxu0 0.0
        %795 = vmatprep.mubr.f32.mxu0 0.0
        %796 = vmatmul.mubr.f32.gmra.mrb[0].mxu0 %v729
        %v797 = vpop.f32.mrb[0].mxu0
        %v798 = vadd.f32 %v726, %v797
        %v799 = vpop.f32.mrb[0].mxu0
        %800 = vdwg.mxu0
        %v801 = vmul.f32 %v630, 0.17677669
        %v802 = vld [vmem:[%s544] sm:$0xff]
        %v804 = vsel %vm559, %v801, 0
        %v807 = vsel %vm559, %v714, 0
        %809 = vmatprep.subr.mxu0 0.0
        %810 = vmatpush1.xpose.msra.mxu0 %v807
        %811 = vmatprep.subr.mxu0 0.0
        %812 = vmatpush1.xpose.msra.mxu0 0.0
        %813 = vmatprep.subr.mxu0 0.0
        %814 = vmatpush1.xpose.msra.mxu0 0.0
        %815 = vmatprep.subr.mxu0 0.0
        %816 = vmatpush1.xpose.msra.mxu0 0.0
        %817 = vmatprep.subr.mxu0 0.0
        %818 = vmatpush1.xpose.msra.mxu0 0.0
        %819 = vmatprep.subr.mxu0 0.0
        %820 = vmatpush1.xpose.msra.mxu0 0.0
        %821 = vmatprep.subr.mxu0 0.0
        %822 = vmatpush1.xpose.msra.mxu0 0.0
        %823 = vmatprep.subr.mxu0 0.0
        %824 = vmatpush1.xpose.msra.mxu0 0.0
        %825 = vmatprep.subr.mxu0 0.0
        %826 = vmatpush1.xpose.msra.mxu0 0.0
        %827 = vmatprep.subr.mxu0 0.0
        %828 = vmatpush1.xpose.msra.mxu0 0.0
        %829 = vmatprep.subr.mxu0 0.0
        %830 = vmatpush1.xpose.msra.mxu0 0.0
        %831 = vmatprep.subr.mxu0 0.0
        %832 = vmatpush1.xpose.msra.mxu0 0.0
        %833 = vmatprep.subr.mxu0 0.0
        %834 = vmatpush1.xpose.msra.mxu0 0.0
        %835 = vmatprep.subr.mxu0 0.0
        %836 = vmatpush1.xpose.msra.mxu0 0.0
        %837 = vmatprep.subr.mxu0 0.0
        %838 = vmatpush1.xpose.msra.mxu0 0.0
        %839 = vmatprep.subr.mxu0 0.0
        %840 = vmatpush1.xpose.msra.mxu0 0.0
        %841 = vmatprep.subr.mxu0 0.0
        %842 = vmatpush1.xpose.msra.mxu0 0.0
        %843 = vmatprep.subr.mxu0 0.0
        %844 = vmatpush1.xpose.msra.mxu0 0.0
        %845 = vmatprep.subr.mxu0 0.0
        %846 = vmatpush1.xpose.msra.mxu0 0.0
        %847 = vmatprep.subr.mxu0 0.0
        %848 = vmatpush1.xpose.msra.mxu0 0.0
        %849 = vmatprep.subr.mxu0 0.0
        %850 = vmatpush1.xpose.msra.mxu0 0.0
        %851 = vmatprep.subr.mxu0 0.0
        %852 = vmatpush1.xpose.msra.mxu0 0.0
        %853 = vmatprep.subr.mxu0 0.0
        %854 = vmatpush1.xpose.msra.mxu0 0.0
        %855 = vmatprep.subr.mxu0 0.0
        %856 = vmatpush1.xpose.msra.mxu0 0.0
        %857 = vmatprep.subr.mxu0 0.0
        %858 = vmatpush1.xpose.msra.mxu0 0.0
        %859 = vmatprep.subr.mxu0 0.0
        %860 = vmatpush1.xpose.msra.mxu0 0.0
        %861 = vmatprep.subr.mxu0 0.0
        %862 = vmatpush1.xpose.msra.mxu0 0.0
        %863 = vmatprep.subr.mxu0 0.0
        %864 = vmatpush1.xpose.msra.mxu0 0.0
        %865 = vmatprep.subr.mxu0 0.0
        %866 = vmatpush1.xpose.msra.mxu0 0.0
        %867 = vmatprep.subr.mxu0 0.0
        %868 = vmatpush1.xpose.msra.mxu0 0.0
        %869 = vmatprep.subr.mxu0 0.0
        %870 = vmatpush1.xpose.msra.mxu0 0.0
        %871 = vmatprep.subr.mxu0 0.0
        %872 = vmatpush1.xpose.msra.mxu0 0.0
        %873 = vmatprep.mubr.f32.mxu0 0.0
        %874 = vmatmul.mubr.f32.gmra.mrb[0].mxu0 %v804
        %v875 = vpop.f32.mrb[0].mxu0
        %v876 = vadd.f32 %v802, %v875
        %v877 = vpop.f32.mrb[0].mxu0
        %878 = vdwg.mxu0
        %vm879 = vcmask 64512
        %v880 = vsel %vm879, %v876, -inf
        %881 = vmax.xlane.f32.xlu0 %v880
        %v882 = vpop.xlane.xlu0 %881
        %v883 = vsub.f32 %v876, %v882
        %v884 = vmul.f32 %v883, 1.442695
        %v885 = vpow.pop %v884
        %v886 = vsel %vm879, %v885, 0.0
        %887 = vadd.xlane.f32.xlu0 %v886
        %v888 = vpop.xlane.xlu0 %887
        %v889 = vrcp.pop %v888
        %v890 = vmul.f32 %v885, %v889
        %891 = vst.msk [vmem:[%s540] sm:$0xff] %vm879, %v890
        %v893 = vsel %vm879, %v890, 0
        %895 = vmatprep.subr.mxu0 0.0
        %896 = vmatpush1.msra.mxu0 %v798
        %897 = vmatprep.subr.mxu0 0.0
        %898 = vmatpush1.msra.mxu0 0.0
        %899 = vmatprep.subr.mxu0 0.0
        %900 = vmatpush1.msra.mxu0 0.0
        %901 = vmatprep.subr.mxu0 0.0
        %902 = vmatpush1.msra.mxu0 0.0
        %903 = vmatprep.subr.mxu0 0.0
        %904 = vmatpush1.msra.mxu0 0.0
        %905 = vmatprep.subr.mxu0 0.0
        %906 = vmatpush1.msra.mxu0 0.0
        %907 = vmatprep.subr.mxu0 0.0
        %908 = vmatpush1.msra.mxu0 0.0
        %909 = vmatprep.subr.mxu0 0.0
        %910 = vmatpush1.msra.mxu0 0.0
        %911 = vmatprep.subr.mxu0 0.0
        %912 = vmatpush1.msra.mxu0 0.0
        %913 = vmatprep.subr.mxu0 0.0
        %914 = vmatpush1.msra.mxu0 0.0
        %915 = vmatprep.subr.mxu0 0.0
        %916 = vmatpush1.msra.mxu0 0.0
        %917 = vmatprep.subr.mxu0 0.0
        %918 = vmatpush1.msra.mxu0 0.0
        %919 = vmatprep.subr.mxu0 0.0
        %920 = vmatpush1.msra.mxu0 0.0
        %921 = vmatprep.subr.mxu0 0.0
        %922 = vmatpush1.msra.mxu0 0.0
        %923 = vmatprep.subr.mxu0 0.0
        %924 = vmatpush1.msra.mxu0 0.0
        %925 = vmatprep.subr.mxu0 0.0
        %926 = vmatpush1.msra.mxu0 0.0
        %927 = vmatprep.subr.mxu0 0.0
        %928 = vmatpush1.msra.mxu0 0.0
        %929 = vmatprep.subr.mxu0 0.0
        %930 = vmatpush1.msra.mxu0 0.0
        %931 = vmatprep.subr.mxu0 0.0
        %932 = vmatpush1.msra.mxu0 0.0
        %933 = vmatprep.subr.mxu0 0.0
        %934 = vmatpush1.msra.mxu0 0.0
        %935 = vmatprep.subr.mxu0 0.0
        %936 = vmatpush1.msra.mxu0 0.0
        %937 = vmatprep.subr.mxu0 0.0
        %938 = vmatpush1.msra.mxu0 0.0
        %939 = vmatprep.subr.mxu0 0.0
        %940 = vmatpush1.msra.mxu0 0.0
        %941 = vmatprep.subr.mxu0 0.0
        %942 = vmatpush1.msra.mxu0 0.0
        %943 = vmatprep.subr.mxu0 0.0
        %944 = vmatpush1.msra.mxu0 0.0
        %945 = vmatprep.subr.mxu0 0.0
        %946 = vmatpush1.msra.mxu0 0.0
        %947 = vmatprep.subr.mxu0 0.0
        %948 = vmatpush1.msra.mxu0 0.0
        %949 = vmatprep.subr.mxu0 0.0
        %950 = vmatpush1.msra.mxu0 0.0
        %951 = vmatprep.subr.mxu0 0.0
        %952 = vmatpush1.msra.mxu0 0.0
        %953 = vmatprep.subr.mxu0 0.0
        %954 = vmatpush1.msra.mxu0 0.0
        %955 = vmatprep.subr.mxu0 0.0
        %956 = vmatpush1.msra.mxu0 0.0
        %957 = vmatprep.subr.mxu0 0.0
        %958 = vmatpush1.msra.mxu0 0.0
        %959 = vmatprep.mubr.f32.mxu0 0.0
        %960 = vmatmul.mubr.f32.gmra.mrb[0].mxu0 %v893
        %v961 = vpop.f32.mrb[0].mxu0
        %v962 = vadd.f32 0.0, %v961
        %v963 = vpop.f32.mrb[0].mxu0
        %964 = vdwg.mxu0
        %965 = vrot.lane.b32.xlu0 %v801, 96
        %v966 = vpop.permute.xlu0 %965
        %967 = vrot.lane.b32.xlu0 %v714, 96
        %v968 = vpop.permute.xlu0 %967
        %v969 = vsel %vm559, %v966, 0
        %v971 = vsel %vm559, %v968, 0
        %973 = vmatprep.subr.mxu0 0.0
        %974 = vmatpush1.xpose.msra.mxu0 %v971
        %975 = vmatprep.subr.mxu0 0.0
        %976 = vmatpush1.xpose.msra.mxu0 0.0
        %977 = vmatprep.subr.mxu0 0.0
        %978 = vmatpush1.xpose.msra.mxu0 0.0
        %979 = vmatprep.subr.mxu0 0.0
        %980 = vmatpush1.xpose.msra.mxu0 0.0
        %981 = vmatprep.subr.mxu0 0.0
        %982 = vmatpush1.xpose.msra.mxu0 0.0
        %983 = vmatprep.subr.mxu0 0.0
        %984 = vmatpush1.xpose.msra.mxu0 0.0
        %985 = vmatprep.subr.mxu0 0.0
        %986 = vmatpush1.xpose.msra.mxu0 0.0
        %987 = vmatprep.subr.mxu0 0.0
        %988 = vmatpush1.xpose.msra.mxu0 0.0
        %989 = vmatprep.subr.mxu0 0.0
        %990 = vmatpush1.xpose.msra.mxu0 0.0
        %991 = vmatprep.subr.mxu0 0.0
        %992 = vmatpush1.xpose.msra.mxu0 0.0
        %993 = vmatprep.subr.mxu0 0.0
        %994 = vmatpush1.xpose.msra.mxu0 0.0
        %995 = vmatprep.subr.mxu0 0.0
        %996 = vmatpush1.xpose.msra.mxu0 0.0
        %997 = vmatprep.subr.mxu0 0.0
        %998 = vmatpush1.xpose.msra.mxu0 0.0
        %999 = vmatprep.subr.mxu0 0.0
        %1000 = vmatpush1.xpose.msra.mxu0 0.0
        %1001 = vmatprep.subr.mxu0 0.0
        %1002 = vmatpush1.xpose.msra.mxu0 0.0
        %1003 = vmatprep.subr.mxu0 0.0
        %1004 = vmatpush1.xpose.msra.mxu0 0.0
        %1005 = vmatprep.subr.mxu0 0.0
        %1006 = vmatpush1.xpose.msra.mxu0 0.0
        %1007 = vmatprep.subr.mxu0 0.0
        %1008 = vmatpush1.xpose.msra.mxu0 0.0
        %1009 = vmatprep.subr.mxu0 0.0
        %1010 = vmatpush1.xpose.msra.mxu0 0.0
        %1011 = vmatprep.subr.mxu0 0.0
        %1012 = vmatpush1.xpose.msra.mxu0 0.0
        %1013 = vmatprep.subr.mxu0 0.0
        %1014 = vmatpush1.xpose.msra.mxu0 0.0
        %1015 = vmatprep.subr.mxu0 0.0
        %1016 = vmatpush1.xpose.msra.mxu0 0.0
        %1017 = vmatprep.subr.mxu0 0.0
        %1018 = vmatpush1.xpose.msra.mxu0 0.0
        %1019 = vmatprep.subr.mxu0 0.0
        %1020 = vmatpush1.xpose.msra.mxu0 0.0
        %1021 = vmatprep.subr.mxu0 0.0
        %1022 = vmatpush1.xpose.msra.mxu0 0.0
        %1023 = vmatprep.subr.mxu0 0.0
        %1024 = vmatpush1.xpose.msra.mxu0 0.0
        %1025 = vmatprep.subr.mxu0 0.0
        %1026 = vmatpush1.xpose.msra.mxu0 0.0
        %1027 = vmatprep.subr.mxu0 0.0
        %1028 = vmatpush1.xpose.msra.mxu0 0.0
        %1029 = vmatprep.subr.mxu0 0.0
        %1030 = vmatpush1.xpose.msra.mxu0 0.0
        %1031 = vmatprep.subr.mxu0 0.0
        %1032 = vmatpush1.xpose.msra.mxu0 0.0
        %1033 = vmatprep.subr.mxu0 0.0
        %1034 = vmatpush1.xpose.msra.mxu0 0.0
        %1035 = vmatprep.subr.mxu0 0.0
        %1036 = vmatpush1.xpose.msra.mxu0 0.0
        %1037 = vmatprep.mubr.f32.mxu0 0.0
        %1038 = vmatmul.mubr.f32.gmra.mrb[0].mxu0 %v969
        %v1039 = vpop.f32.mrb[0].mxu0
        %v1040 = vadd.f32 %v802, %v1039
        %v1041 = vpop.f32.mrb[0].mxu0
        %1042 = vdwg.mxu0
        %v1043 = vsel %vm879, %v1040, -inf
        %1044 = vmax.xlane.f32.xlu0 %v1043
        %v1045 = vpop.xlane.xlu0 %1044
        %v1046 = vsub.f32 %v1040, %v1045
        %v1047 = vmul.f32 %v1046, 1.442695
        %v1048 = vpow.pop %v1047
        %v1049 = vsel %vm879, %v1048, 0.0
        %1050 = vadd.xlane.f32.xlu0 %v1049
        %v1051 = vpop.xlane.xlu0 %1050
        %v1052 = vrcp.pop %v1051
        %v1053 = vmul.f32 %v1048, %v1052
        %s1054 = scalar_lea.vmem %s540, 8 [#allocation14]
        %1055 = vst.msk [vmem:[%s1054] sm:$0xff] %vm879, %v1053
        %1057 = vrot.lane.b32.xlu0 %v798, 96
        %v1058 = vpop.permute.xlu0 %1057
        %v1061 = vsel %vm879, %v1053, 0
        %1063 = vmatprep.subr.mxu0 0.0
        %1064 = vmatpush1.msra.mxu0 %v1058
        %1065 = vmatprep.subr.mxu0 0.0
        %1066 = vmatpush1.msra.mxu0 0.0
        %1067 = vmatprep.subr.mxu0 0.0
        %1068 = vmatpush1.msra.mxu0 0.0
        %1069 = vmatprep.subr.mxu0 0.0
        %1070 = vmatpush1.msra.mxu0 0.0
        %1071 = vmatprep.subr.mxu0 0.0
        %1072 = vmatpush1.msra.mxu0 0.0
        %1073 = vmatprep.subr.mxu0 0.0
        %1074 = vmatpush1.msra.mxu0 0.0
        %1075 = vmatprep.subr.mxu0 0.0
        %1076 = vmatpush1.msra.mxu0 0.0
        %1077 = vmatprep.subr.mxu0 0.0
        %1078 = vmatpush1.msra.mxu0 0.0
        %1079 = vmatprep.subr.mxu0 0.0
        %1080 = vmatpush1.msra.mxu0 0.0
        %1081 = vmatprep.subr.mxu0 0.0
        %1082 = vmatpush1.msra.mxu0 0.0
        %1083 = vmatprep.subr.mxu0 0.0
        %1084 = vmatpush1.msra.mxu0 0.0
        %1085 = vmatprep.subr.mxu0 0.0
        %1086 = vmatpush1.msra.mxu0 0.0
        %1087 = vmatprep.subr.mxu0 0.0
        %1088 = vmatpush1.msra.mxu0 0.0
        %1089 = vmatprep.subr.mxu0 0.0
        %1090 = vmatpush1.msra.mxu0 0.0
        %1091 = vmatprep.subr.mxu0 0.0
        %1092 = vmatpush1.msra.mxu0 0.0
        %1093 = vmatprep.subr.mxu0 0.0
        %1094 = vmatpush1.msra.mxu0 0.0
        %1095 = vmatprep.subr.mxu0 0.0
        %1096 = vmatpush1.msra.mxu0 0.0
        %1097 = vmatprep.subr.mxu0 0.0
        %1098 = vmatpush1.msra.mxu0 0.0
        %1099 = vmatprep.subr.mxu0 0.0
        %1100 = vmatpush1.msra.mxu0 0.0
        %1101 = vmatprep.subr.mxu0 0.0
        %1102 = vmatpush1.msra.mxu0 0.0
        %1103 = vmatprep.subr.mxu0 0.0
        %1104 = vmatpush1.msra.mxu0 0.0
        %1105 = vmatprep.subr.mxu0 0.0
        %1106 = vmatpush1.msra.mxu0 0.0
        %1107 = vmatprep.subr.mxu0 0.0
        %1108 = vmatpush1.msra.mxu0 0.0
        %1109 = vmatprep.subr.mxu0 0.0
        %1110 = vmatpush1.msra.mxu0 0.0
        %1111 = vmatprep.subr.mxu0 0.0
        %1112 = vmatpush1.msra.mxu0 0.0
        %1113 = vmatprep.subr.mxu0 0.0
        %1114 = vmatpush1.msra.mxu0 0.0
        %1115 = vmatprep.subr.mxu0 0.0
        %1116 = vmatpush1.msra.mxu0 0.0
        %1117 = vmatprep.subr.mxu0 0.0
        %1118 = vmatpush1.msra.mxu0 0.0
        %1119 = vmatprep.subr.mxu0 0.0
        %1120 = vmatpush1.msra.mxu0 0.0
        %1121 = vmatprep.subr.mxu0 0.0
        %1122 = vmatpush1.msra.mxu0 0.0
        %1123 = vmatprep.subr.mxu0 0.0
        %1124 = vmatpush1.msra.mxu0 0.0
        %1125 = vmatprep.subr.mxu0 0.0
        %1126 = vmatpush1.msra.mxu0 0.0
        %1127 = vmatprep.mubr.f32.mxu0 0.0
        %1128 = vmatmul.mubr.f32.gmra.mrb[0].mxu0 %v1061
        %v1129 = vpop.f32.mrb[0].mxu0
        %v1130 = vadd.f32 0.0, %v1129
        %v1131 = vpop.f32.mrb[0].mxu0
        %1132 = vdwg.mxu0
        %1133 = vrot.lane.b32.xlu0 %v801, 64
        %v1134 = vpop.permute.xlu0 %1133
        %1135 = vrot.lane.b32.xlu0 %v714, 64
        %v1136 = vpop.permute.xlu0 %1135
        %v1137 = vsel %vm559, %v1134, 0
        %v1139 = vsel %vm559, %v1136, 0
        %1141 = vmatprep.subr.mxu0 0.0
        %1142 = vmatpush1.xpose.msra.mxu0 %v1139
        %1143 = vmatprep.subr.mxu0 0.0
        %1144 = vmatpush1.xpose.msra.mxu0 0.0
        %1145 = vmatprep.subr.mxu0 0.0
        %1146 = vmatpush1.xpose.msra.mxu0 0.0
        %1147 = vmatprep.subr.mxu0 0.0
        %1148 = vmatpush1.xpose.msra.mxu0 0.0
        %1149 = vmatprep.subr.mxu0 0.0
        %1150 = vmatpush1.xpose.msra.mxu0 0.0
        %1151 = vmatprep.subr.mxu0 0.0
        %1152 = vmatpush1.xpose.msra.mxu0 0.0
        %1153 = vmatprep.subr.mxu0 0.0
        %1154 = vmatpush1.xpose.msra.mxu0 0.0
        %1155 = vmatprep.subr.mxu0 0.0
        %1156 = vmatpush1.xpose.msra.mxu0 0.0
        %1157 = vmatprep.subr.mxu0 0.0
        %1158 = vmatpush1.xpose.msra.mxu0 0.0
        %1159 = vmatprep.subr.mxu0 0.0
        %1160 = vmatpush1.xpose.msra.mxu0 0.0
        %1161 = vmatprep.subr.mxu0 0.0
        %1162 = vmatpush1.xpose.msra.mxu0 0.0
        %1163 = vmatprep.subr.mxu0 0.0
        %1164 = vmatpush1.xpose.msra.mxu0 0.0
        %1165 = vmatprep.subr.mxu0 0.0
        %1166 = vmatpush1.xpose.msra.mxu0 0.0
        %1167 = vmatprep.subr.mxu0 0.0
        %1168 = vmatpush1.xpose.msra.mxu0 0.0
        %1169 = vmatprep.subr.mxu0 0.0
        %1170 = vmatpush1.xpose.msra.mxu0 0.0
        %1171 = vmatprep.subr.mxu0 0.0
        %1172 = vmatpush1.xpose.msra.mxu0 0.0
        %1173 = vmatprep.subr.mxu0 0.0
        %1174 = vmatpush1.xpose.msra.mxu0 0.0
        %1175 = vmatprep.subr.mxu0 0.0
        %1176 = vmatpush1.xpose.msra.mxu0 0.0
        %1177 = vmatprep.subr.mxu0 0.0
        %1178 = vmatpush1.xpose.msra.mxu0 0.0
        %1179 = vmatprep.subr.mxu0 0.0
        %1180 = vmatpush1.xpose.msra.mxu0 0.0
        %1181 = vmatprep.subr.mxu0 0.0
        %1182 = vmatpush1.xpose.msra.mxu0 0.0
        %1183 = vmatprep.subr.mxu0 0.0
        %1184 = vmatpush1.xpose.msra.mxu0 0.0
        %1185 = vmatprep.subr.mxu0 0.0
        %1186 = vmatpush1.xpose.msra.mxu0 0.0
        %1187 = vmatprep.subr.mxu0 0.0
        %1188 = vmatpush1.xpose.msra.mxu0 0.0
        %1189 = vmatprep.subr.mxu0 0.0
        %1190 = vmatpush1.xpose.msra.mxu0 0.0
        %1191 = vmatprep.subr.mxu0 0.0
        %1192 = vmatpush1.xpose.msra.mxu0 0.0
        %1193 = vmatprep.subr.mxu0 0.0
        %1194 = vmatpush1.xpose.msra.mxu0 0.0
        %1195 = vmatprep.subr.mxu0 0.0
        %1196 = vmatpush1.xpose.msra.mxu0 0.0
        %1197 = vmatprep.subr.mxu0 0.0
        %1198 = vmatpush1.xpose.msra.mxu0 0.0
        %1199 = vmatprep.subr.mxu0 0.0
        %1200 = vmatpush1.xpose.msra.mxu0 0.0
        %1201 = vmatprep.subr.mxu0 0.0
        %1202 = vmatpush1.xpose.msra.mxu0 0.0
        %1203 = vmatprep.subr.mxu0 0.0
        %1204 = vmatpush1.xpose.msra.mxu0 0.0
        %1205 = vmatprep.mubr.f32.mxu0 0.0
        %1206 = vmatmul.mubr.f32.gmra.mrb[0].mxu0 %v1137
        %v1207 = vpop.f32.mrb[0].mxu0
        %v1208 = vadd.f32 %v802, %v1207
        %v1209 = vpop.f32.mrb[0].mxu0
        %1210 = vdwg.mxu0
        %v1211 = vsel %vm879, %v1208, -inf
        %1212 = vmax.xlane.f32.xlu0 %v1211
        %v1213 = vpop.xlane.xlu0 %1212
        %v1214 = vsub.f32 %v1208, %v1213
        %v1215 = vmul.f32 %v1214, 1.442695
        %v1216 = vpow.pop %v1215
        %v1217 = vsel %vm879, %v1216, 0.0
        %1218 = vadd.xlane.f32.xlu0 %v1217
        %v1219 = vpop.xlane.xlu0 %1218
        %v1220 = vrcp.pop %v1219
        %v1221 = vmul.f32 %v1216, %v1220
        %s1222 = scalar_lea.vmem %s540, 16 [#allocation14]
        %1223 = vst.msk [vmem:[%s1222] sm:$0xff] %vm879, %v1221
        %1224 = vrot.lane.b32.xlu0 %v798, 64
        %v1225 = vpop.permute.xlu0 %1224
        %v1228 = vsel %vm879, %v1221, 0
        %1230 = vmatprep.subr.mxu0 0.0
        %1231 = vmatpush1.msra.mxu0 %v1225
        %1232 = vmatprep.subr.mxu0 0.0
        %1233 = vmatpush1.msra.mxu0 0.0
        %1234 = vmatprep.subr.mxu0 0.0
        %1235 = vmatpush1.msra.mxu0 0.0
        %1236 = vmatprep.subr.mxu0 0.0
        %1237 = vmatpush1.msra.mxu0 0.0
        %1238 = vmatprep.subr.mxu0 0.0
        %1239 = vmatpush1.msra.mxu0 0.0
        %1240 = vmatprep.subr.mxu0 0.0
        %1241 = vmatpush1.msra.mxu0 0.0
        %1242 = vmatprep.subr.mxu0 0.0
        %1243 = vmatpush1.msra.mxu0 0.0
        %1244 = vmatprep.subr.mxu0 0.0
        %1245 = vmatpush1.msra.mxu0 0.0
        %1246 = vmatprep.subr.mxu0 0.0
        %1247 = vmatpush1.msra.mxu0 0.0
        %1248 = vmatprep.subr.mxu0 0.0
        %1249 = vmatpush1.msra.mxu0 0.0
        %1250 = vmatprep.subr.mxu0 0.0
        %1251 = vmatpush1.msra.mxu0 0.0
        %1252 = vmatprep.subr.mxu0 0.0
        %1253 = vmatpush1.msra.mxu0 0.0
        %1254 = vmatprep.subr.mxu0 0.0
        %1255 = vmatpush1.msra.mxu0 0.0
        %1256 = vmatprep.subr.mxu0 0.0
        %1257 = vmatpush1.msra.mxu0 0.0
        %1258 = vmatprep.subr.mxu0 0.0
        %1259 = vmatpush1.msra.mxu0 0.0
        %1260 = vmatprep.subr.mxu0 0.0
        %1261 = vmatpush1.msra.mxu0 0.0
        %1262 = vmatprep.subr.mxu0 0.0
        %1263 = vmatpush1.msra.mxu0 0.0
        %1264 = vmatprep.subr.mxu0 0.0
        %1265 = vmatpush1.msra.mxu0 0.0
        %1266 = vmatprep.subr.mxu0 0.0
        %1267 = vmatpush1.msra.mxu0 0.0
        %1268 = vmatprep.subr.mxu0 0.0
        %1269 = vmatpush1.msra.mxu0 0.0
        %1270 = vmatprep.subr.mxu0 0.0
        %1271 = vmatpush1.msra.mxu0 0.0
        %1272 = vmatprep.subr.mxu0 0.0
        %1273 = vmatpush1.msra.mxu0 0.0
        %1274 = vmatprep.subr.mxu0 0.0
        %1275 = vmatpush1.msra.mxu0 0.0
        %1276 = vmatprep.subr.mxu0 0.0
        %1277 = vmatpush1.msra.mxu0 0.0
        %1278 = vmatprep.subr.mxu0 0.0
        %1279 = vmatpush1.msra.mxu0 0.0
        %1280 = vmatprep.subr.mxu0 0.0
        %1281 = vmatpush1.msra.mxu0 0.0
        %1282 = vmatprep.subr.mxu0 0.0
        %1283 = vmatpush1.msra.mxu0 0.0
        %1284 = vmatprep.subr.mxu0 0.0
        %1285 = vmatpush1.msra.mxu0 0.0
        %1286 = vmatprep.subr.mxu0 0.0
        %1287 = vmatpush1.msra.mxu0 0.0
        %1288 = vmatprep.subr.mxu0 0.0
        %1289 = vmatpush1.msra.mxu0 0.0
        %1290 = vmatprep.subr.mxu0 0.0
        %1291 = vmatpush1.msra.mxu0 0.0
        %1292 = vmatprep.subr.mxu0 0.0
        %1293 = vmatpush1.msra.mxu0 0.0
        %1294 = vmatprep.mubr.f32.mxu0 0.0
        %1295 = vmatmul.mubr.f32.gmra.mrb[0].mxu0 %v1228
        %v1296 = vpop.f32.mrb[0].mxu0
        %v1297 = vadd.f32 0.0, %v1296
        %v1298 = vpop.f32.mrb[0].mxu0
        %1299 = vdwg.mxu0
        %1300 = vrot.lane.b32.xlu0 %v801, 32
        %v1301 = vpop.permute.xlu0 %1300
        %1302 = vrot.lane.b32.xlu0 %v714, 32
        %v1303 = vpop.permute.xlu0 %1302
        %v1304 = vsel %vm559, %v1301, 0
        %v1306 = vsel %vm559, %v1303, 0
        %1308 = vmatprep.subr.mxu0 0.0
        %1309 = vmatpush1.xpose.msra.mxu0 %v1306
        %1310 = vmatprep.subr.mxu0 0.0
        %1311 = vmatpush1.xpose.msra.mxu0 0.0
        %1312 = vmatprep.subr.mxu0 0.0
        %1313 = vmatpush1.xpose.msra.mxu0 0.0
        %1314 = vmatprep.subr.mxu0 0.0
        %1315 = vmatpush1.xpose.msra.mxu0 0.0
        %1316 = vmatprep.subr.mxu0 0.0
        %1317 = vmatpush1.xpose.msra.mxu0 0.0
        %1318 = vmatprep.subr.mxu0 0.0
        %1319 = vmatpush1.xpose.msra.mxu0 0.0
        %1320 = vmatprep.subr.mxu0 0.0
        %1321 = vmatpush1.xpose.msra.mxu0 0.0
        %1322 = vmatprep.subr.mxu0 0.0
        %1323 = vmatpush1.xpose.msra.mxu0 0.0
        %1324 = vmatprep.subr.mxu0 0.0
        %1325 = vmatpush1.xpose.msra.mxu0 0.0
        %1326 = vmatprep.subr.mxu0 0.0
        %1327 = vmatpush1.xpose.msra.mxu0 0.0
        %1328 = vmatprep.subr.mxu0 0.0
        %1329 = vmatpush1.xpose.msra.mxu0 0.0
        %1330 = vmatprep.subr.mxu0 0.0
        %1331 = vmatpush1.xpose.msra.mxu0 0.0
        %1332 = vmatprep.subr.mxu0 0.0
        %1333 = vmatpush1.xpose.msra.mxu0 0.0
        %1334 = vmatprep.subr.mxu0 0.0
        %1335 = vmatpush1.xpose.msra.mxu0 0.0
        %1336 = vmatprep.subr.mxu0 0.0
        %1337 = vmatpush1.xpose.msra.mxu0 0.0
        %1338 = vmatprep.subr.mxu0 0.0
        %1339 = vmatpush1.xpose.msra.mxu0 0.0
        %1340 = vmatprep.subr.mxu0 0.0
        %1341 = vmatpush1.xpose.msra.mxu0 0.0
        %1342 = vmatprep.subr.mxu0 0.0
        %1343 = vmatpush1.xpose.msra.mxu0 0.0
        %1344 = vmatprep.subr.mxu0 0.0
        %1345 = vmatpush1.xpose.msra.mxu0 0.0
        %1346 = vmatprep.subr.mxu0 0.0
        %1347 = vmatpush1.xpose.msra.mxu0 0.0
        %1348 = vmatprep.subr.mxu0 0.0
        %1349 = vmatpush1.xpose.msra.mxu0 0.0
        %1350 = vmatprep.subr.mxu0 0.0
        %1351 = vmatpush1.xpose.msra.mxu0 0.0
        %1352 = vmatprep.subr.mxu0 0.0
        %1353 = vmatpush1.xpose.msra.mxu0 0.0
        %1354 = vmatprep.subr.mxu0 0.0
        %1355 = vmatpush1.xpose.msra.mxu0 0.0
        %1356 = vmatprep.subr.mxu0 0.0
        %1357 = vmatpush1.xpose.msra.mxu0 0.0
        %1358 = vmatprep.subr.mxu0 0.0
        %1359 = vmatpush1.xpose.msra.mxu0 0.0
        %1360 = vmatprep.subr.mxu0 0.0
        %1361 = vmatpush1.xpose.msra.mxu0 0.0
        %1362 = vmatprep.subr.mxu0 0.0
        %1363 = vmatpush1.xpose.msra.mxu0 0.0
        %1364 = vmatprep.subr.mxu0 0.0
        %1365 = vmatpush1.xpose.msra.mxu0 0.0
        %1366 = vmatprep.subr.mxu0 0.0
        %1367 = vmatpush1.xpose.msra.mxu0 0.0
        %1368 = vmatprep.subr.mxu0 0.0
        %1369 = vmatpush1.xpose.msra.mxu0 0.0
        %1370 = vmatprep.subr.mxu0 0.0
        %1371 = vmatpush1.xpose.msra.mxu0 0.0
        %1372 = vmatprep.mubr.f32.mxu0 0.0
        %1373 = vmatmul.mubr.f32.gmra.mrb[0].mxu0 %v1304
        %v1374 = vpop.f32.mrb[0].mxu0
        %v1375 = vadd.f32 %v802, %v1374
        %v1376 = vpop.f32.mrb[0].mxu0
        %1377 = vdwg.mxu0
        %v1378 = vsel %vm879, %v1375, -inf
        %1379 = vmax.xlane.f32.xlu0 %v1378
        %v1380 = vpop.xlane.xlu0 %1379
        %v1381 = vsub.f32 %v1375, %v1380
        %v1382 = vmul.f32 %v1381, 1.442695
        %v1383 = vpow.pop %v1382
        %v1384 = vsel %vm879, %v1383, 0.0
        %1385 = vadd.xlane.f32.xlu0 %v1384
        %v1386 = vpop.xlane.xlu0 %1385
        %v1387 = vrcp.pop %v1386
        %v1388 = vmul.f32 %v1383, %v1387
        %s1389 = scalar_lea.vmem %s540, 24 [#allocation14]
        %1390 = vst.msk [vmem:[%s1389] sm:$0xff] %vm879, %v1388
        %1391 = vrot.lane.b32.xlu0 %v798, 32
        %v1392 = vpop.permute.xlu0 %1391
        %v1395 = vsel %vm879, %v1388, 0
        %1397 = vmatprep.subr.mxu0 0.0
        %1398 = vmatpush1.msra.mxu0 %v1392
        %1399 = vmatprep.subr.mxu0 0.0
        %1400 = vmatpush1.msra.mxu0 0.0
        %1401 = vmatprep.subr.mxu0 0.0
        %1402 = vmatpush1.msra.mxu0 0.0
        %1403 = vmatprep.subr.mxu0 0.0
        %1404 = vmatpush1.msra.mxu0 0.0
        %1405 = vmatprep.subr.mxu0 0.0
        %1406 = vmatpush1.msra.mxu0 0.0
        %1407 = vmatprep.subr.mxu0 0.0
        %1408 = vmatpush1.msra.mxu0 0.0
        %1409 = vmatprep.subr.mxu0 0.0
        %1410 = vmatpush1.msra.mxu0 0.0
        %1411 = vmatprep.subr.mxu0 0.0
        %1412 = vmatpush1.msra.mxu0 0.0
        %1413 = vmatprep.subr.mxu0 0.0
        %1414 = vmatpush1.msra.mxu0 0.0
        %1415 = vmatprep.subr.mxu0 0.0
        %1416 = vmatpush1.msra.mxu0 0.0
        %1417 = vmatprep.subr.mxu0 0.0
        %1418 = vmatpush1.msra.mxu0 0.0
        %1419 = vmatprep.subr.mxu0 0.0
        %1420 = vmatpush1.msra.mxu0 0.0
        %1421 = vmatprep.subr.mxu0 0.0
        %1422 = vmatpush1.msra.mxu0 0.0
        %1423 = vmatprep.subr.mxu0 0.0
        %1424 = vmatpush1.msra.mxu0 0.0
        %1425 = vmatprep.subr.mxu0 0.0
        %1426 = vmatpush1.msra.mxu0 0.0
        %1427 = vmatprep.subr.mxu0 0.0
        %1428 = vmatpush1.msra.mxu0 0.0
        %1429 = vmatprep.subr.mxu0 0.0
        %1430 = vmatpush1.msra.mxu0 0.0
        %1431 = vmatprep.subr.mxu0 0.0
        %1432 = vmatpush1.msra.mxu0 0.0
        %1433 = vmatprep.subr.mxu0 0.0
        %1434 = vmatpush1.msra.mxu0 0.0
        %1435 = vmatprep.subr.mxu0 0.0
        %1436 = vmatpush1.msra.mxu0 0.0
        %1437 = vmatprep.subr.mxu0 0.0
        %1438 = vmatpush1.msra.mxu0 0.0
        %1439 = vmatprep.subr.mxu0 0.0
        %1440 = vmatpush1.msra.mxu0 0.0
        %1441 = vmatprep.subr.mxu0 0.0
        %1442 = vmatpush1.msra.mxu0 0.0
        %1443 = vmatprep.subr.mxu0 0.0
        %1444 = vmatpush1.msra.mxu0 0.0
        %1445 = vmatprep.subr.mxu0 0.0
        %1446 = vmatpush1.msra.mxu0 0.0
        %1447 = vmatprep.subr.mxu0 0.0
        %1448 = vmatpush1.msra.mxu0 0.0
        %1449 = vmatprep.subr.mxu0 0.0
        %1450 = vmatpush1.msra.mxu0 0.0
        %1451 = vmatprep.subr.mxu0 0.0
        %1452 = vmatpush1.msra.mxu0 0.0
        %1453 = vmatprep.subr.mxu0 0.0
        %1454 = vmatpush1.msra.mxu0 0.0
        %1455 = vmatprep.subr.mxu0 0.0
        %1456 = vmatpush1.msra.mxu0 0.0
        %1457 = vmatprep.subr.mxu0 0.0
        %1458 = vmatpush1.msra.mxu0 0.0
        %1459 = vmatprep.subr.mxu0 0.0
        %1460 = vmatpush1.msra.mxu0 0.0
        %1461 = vmatprep.mubr.f32.mxu0 0.0
        %1462 = vmatmul.mubr.f32.gmra.mrb[0].mxu0 %v1395
        %v1463 = vpop.f32.mrb[0].mxu0
        %v1464 = vadd.f32 0.0, %v1463
        %v1465 = vpop.f32.mrb[0].mxu0
        %1466 = vdwg.mxu0
        %1468 = vrot.lane.b32.xlu0 %v1130, 32
        %v1469 = vpop.permute.xlu0 %1468
        %1472 = vrot.lane.b32.xlu0 %v1297, 64
        %v1473 = vpop.permute.xlu0 %1472
        %1476 = vrot.lane.b32.xlu0 %v1464, 96
        %v1477 = vpop.permute.xlu0 %1476
        %v1479 = vsel %vm559, %v962, %v1469
        %vm1480 = vcmask 523264
        %v1481 = vsel %vm1480, %v1479, %v1473
        %vm1482 = vcmask 785408
        %v1483 = vsel %vm1482, %v1481, %v1477
        %1484 = vst [vmem:[%s533] sm:$0xff] %v1483
        %s1485 = sand.u32 %s275, 1
        %s1486 = scalar_lea.sflag [#allocation4], %s1485
        %s1487 = sand.u32 %s275, 1
        %s1488 = smul.addr %s1487, 8
        %s1489 = scalar_lea.vmem [#allocation13], %s1488
        %s1490 = sand.u32 %s301, 1
        %s1491 = scalar_lea.sflag [#allocation15], %s1490
        %s1492 = sand.u32 %s301, 1
        %s1493 = smul.addr %s1492, 32
        %s1494 = scalar_lea.vmem [#allocation14], %s1493
        // Predicated region
        $region85: #{tpu_custom_call.1} parent=59 // pred_check
          %p1495 = pneg %p285
        $region86: #{tpu_custom_call.1} parent=59 // pred_check_branch
          %1497 = sbr.rel (%p1495) target = $region88
        $region87: #{tpu_custom_call.1} parent=59 // pred_region
          %s1499 = ssub.s32 128, 128
          %1500 = vsyncadd %s1486, %s1499
          %s1501 = smul.addr %s37, 128
          %s1502 = scalar_lea.hbm %s10, %s1501
          %s1504 = sshll.u32 %s1489, 4
          %s1505 = int_to_ptr.vmem [resolvable:$true] %s1504
          %1507 = dma.vmem_to_hbm [thread:$0]  %s1505, 128, %s1502, %s1486
        $region88: #{tpu_custom_call.1} parent=59 // pred_fallthru
          _
        // Predicated region
        $region89: #{tpu_custom_call.1} parent=59 // pred_check
          %p1508 = pneg %p311
        $region90: #{tpu_custom_call.1} parent=59 // pred_check_branch
          %1510 = sbr.rel (%p1508) target = $region92
        $region91: #{tpu_custom_call.1} parent=59 // pred_region
          %s1512 = ssub.s32 512, 512
          %1513 = vsyncadd %s1491, %s1512
          %s1514 = smul.addr %s37, 128
          %s1515 = scalar_lea.hbm %s11, %s1514
          %s1516 = sshll.u32 %s1494, 4
          %s1517 = int_to_ptr.vmem [resolvable:$true] %s1516
          %1522 = dma.vmem_to_hbm [thread:$0]  %s1517, 512, %s1515, %s1491, 128, 256, 8
        $region92: #{tpu_custom_call.1} parent=59 // pred_fallthru
          _
      $region60: #{tpu_custom_call.1} parent=5 // pred_fallthru
        _
      %p1523 = scmp.le.s32.totalorder 2, %s32
      // Predicated region
      $region93: #{tpu_custom_call.1} parent=5 // pred_check
        %p1524 = pneg %p1523
      $region94: #{tpu_custom_call.1} parent=5 // pred_check_branch
        %1526 = sbr.rel (%p1524) target = $region96
      $region95: #{tpu_custom_call.1} parent=5 // pred_region
        %s1527 = ssub.s32 %s32, 2
        // Predicated region
        $region97: #{tpu_custom_call.1} parent=95 // pred_check
          %p1528 = pneg %p291
        $region98: #{tpu_custom_call.1} parent=95 // pred_check_branch
          %1530 = sbr.rel (%p1528) target = $region100
        $region99: #{tpu_custom_call.1} parent=95 // pred_region
          %s1531 = sand.u32 %s276, 1
          %s1532 = scalar_lea.sflag [#allocation4], %s1531
          %s1533 = sand.u32 %s276, 1
          %s1534 = smul.addr %s1533, 8
          %s1535 = scalar_lea.vmem [#allocation13], %s1534
          %1536 = dma.done %s1532, 128
        $region100: #{tpu_custom_call.1} parent=95 // pred_fallthru
          _
        // Predicated region
        $region101: #{tpu_custom_call.1} parent=95 // pred_check
          %p1537 = pneg %p317
        $region102: #{tpu_custom_call.1} parent=95 // pred_check_branch
          %1539 = sbr.rel (%p1537) target = $region104
        $region103: #{tpu_custom_call.1} parent=95 // pred_region
          %s1540 = sand.u32 %s302, 1
          %s1541 = scalar_lea.sflag [#allocation15], %s1540
          %s1542 = sand.u32 %s302, 1
          %s1543 = smul.addr %s1542, 32
          %s1544 = scalar_lea.vmem [#allocation14], %s1543
          %1545 = dma.done %s1541, 512
        $region104: #{tpu_custom_call.1} parent=95 // pred_fallthru
          _
      $region96: #{tpu_custom_call.1} parent=5 // pred_fallthru
        _
    $region6: #{tpu_custom_call.1} parent=1 // loop_footer
      %s36 = sadd.s32 1, %s32
    $region7: #{tpu_custom_call.1} parent=1 // loop_footer_branch
      %31 = sbr.rel target = $region3
    $region8: #{tpu_custom_call.1} parent=1 // loop_exit
      _
    %1546 = vsyncpa [#allocation3], 1
    %s1547 = scalar_lea.sflag [#allocation3], 1
    %1548 = vsyncpa %s1547, 1
    %1549 = vsyncpa [#allocation6], 1
    %s1550 = scalar_lea.sflag [#allocation6], 1
    %1551 = vsyncpa %s1550, 1
    %1552 = vsyncpa [#allocation9], 1
    %1553 = vsyncpa [#allocation12], 1
    %1554 = vsyncpa [#allocation4], 1
    %s1555 = scalar_lea.sflag [#allocation4], 1
    %1556 = vsyncpa %s1555, 1
    %1557 = vsyncpa [#allocation15], 1
    %s1558 = scalar_lea.sflag [#allocation15], 1
    %1559 = vsyncpa %s1558, 1

</llo_original>
